<compile_context>
chip_gen: v7x
topology: tpu7x:2x2x1
jax: 0.10.0
libtpu: 0.0.40
codegen_flags: <defaults>
</compile_context>

<pallas_src>
import jax
import jax.numpy as jnp
import numpy as np
from jax import lax
from jax.experimental import pallas as pl
from jax.experimental.pallas import tpu as pltpu

KSIZE = 7
PAD = KSIZE // 2


def build_conv_matrices(cw, H, W):
    """Express the 7x7, pad-3, no-bias Conv2d(2->1) as one (2*HW, HW) matrix.

    out[i_out] = sum_i avg[i_in] * K[0, i_in, i_out] + max[i_in] * K[1, i_in, i_out]
    with i = y*W + x flattening, matching lax.conv cross-correlation semantics.
    Rows [0, HW) hold the avg-channel taps, rows [HW, 2*HW) the max-channel taps,
    so it pairs with concat([avg, max], axis=-1) in the kernel.

    NOTE: kmat grows quadratically with HW and is only ~19% dense (49/256 taps).
    Fine at HW=256; for HW >= 1024 switch to a banded / 7-shifted-(WxW)-matmul
    decomposition before scaling H, W (hard VMEM wall on v7x).
    """
    yi = np.arange(H)
    xi = np.arange(W)
    dy = yi[:, None] - yi[None, :] + PAD          # (H_in, H_out) tap row
    dx = xi[:, None] - xi[None, :] + PAD          # (W_in, W_out) tap col
    vy = (dy >= 0) & (dy < KSIZE)
    vx = (dx >= 0) & (dx < KSIZE)
    dyc = np.clip(dy, 0, KSIZE - 1)
    dxc = np.clip(dx, 0, KSIZE - 1)
    # km[c, y_in, x_in, y_out, x_out] = cw[c, dy, dx] if tap in-range else 0
    km = cw[:, dyc[:, None, :, None], dxc[None, :, None, :]]      # (2, H, W, H, W)
    valid = (vy[:, None, :, None] & vx[None, :, None, :]).astype(np.float32)
    km = km * valid
    return km.reshape(2 * H * W, H * W)


def cbam_kernel(x_ref, w1t_ref, w2t_ref, kmat_ref, o_ref):
    # x_ref: (N, C, HW) bf16 block of frames; w1t_ref: (C, hid) f32;
    # w2t_ref: (hid, C) f32; kmat_ref: (2*HW, HW) bf16 fused conv-as-matmul
    # weights ([avg; max] stacked along the contraction axis).
    x = x_ref[...].astype(jnp.float32)            # (N, C, HW)
    n, c, hw = x.shape
    inv_hw = jnp.float32(1.0 / hw)
    inv_c = jnp.float32(1.0 / c)

    # ---- Channel attention ----
    maxp = jnp.max(x, axis=2)                     # (N, C)  AdaptiveMaxPool2d(1)
    avgp = jnp.sum(x, axis=2) * inv_hw            # (N, C)  AdaptiveAvgPool2d(1)
    pooled = jnp.concatenate([maxp, avgp], axis=0)  # (2N, C) shared MLP batch

    w1t = w1t_ref[...].astype(jnp.float32)        # (C, hid)
    w2t = w2t_ref[...].astype(jnp.float32)        # (hid, C)
    hid = jnp.maximum(
        jnp.dot(pooled, w1t, preferred_element_type=jnp.float32), 0.0)   # (2N, hid)
    mlp_out = jnp.dot(hid, w2t, preferred_element_type=jnp.float32)      # (2N, C)
    ch_att = jax.nn.sigmoid(mlp_out[:n] + mlp_out[n:])                   # (N, C)

    f_ch = x * ch_att[:, :, None]                 # (N, C, HW) f32

    # ---- Spatial attention ----
    avg_o = jnp.sum(f_ch, axis=1) * inv_c         # (N, HW) channel mean
    max_o = jnp.max(f_ch, axis=1)                 # (N, HW) channel max

    kmat = kmat_ref[...]                          # (2*HW, HW) bf16
    sp_in = jnp.concatenate([avg_o, max_o], axis=-1).astype(kmat.dtype)  # (N, 2*HW)
    conv = jnp.dot(sp_in, kmat, preferred_element_type=jnp.float32)      # (N, HW)
    sp_att = jax.nn.sigmoid(conv)

    o_ref[...] = (f_ch * sp_att[:, None, :]).astype(o_ref.dtype)


def _default_tile_params():
    """frames_per_block / vmem_limit_bytes per chip generation."""
    try:
        vmem_bytes = pltpu.get_tpu_info().vmem_capacity_bytes
    except Exception:
        vmem_bytes = 64 * 1024 * 1024             # assume v7x-like: be conservative
    if vmem_bytes >= 100 * 1024 * 1024:           # v5e / v6e: 128 MiB VMEM
        return 256, 80 * 1024 * 1024
    return 128, 48 * 1024 * 1024                  # v7x: 64 MiB VMEM per TensorCore


def cbam_pallas(f, w1, w2, cw, *, frames_per_block=None, vmem_limit_bytes=None,
                io_dtype=jnp.bfloat16):
    """f: (B, S, C, H, W); w1: (hid, C); w2: (C, hid); cw: (2, 7, 7).

    Returns (B, S, C, H, W) in `io_dtype` (bf16 by default: the kernel is
    HBM-bound, so halving I/O bytes is the dominant win on every generation).
    """
    B, S, C, H, W = f.shape
    HW = H * W
    hid = w1.shape[0]
    total = B * S

    fpb_d, vmem_d = _default_tile_params()
    if frames_per_block is None:
        frames_per_block = fpb_d
    if vmem_limit_bytes is None:
        vmem_limit_bytes = vmem_d

    # Lane-dense layout: flatten spatial dims (HW is the last, 128-lane axis),
    # collapse (B, S) into one frame axis, and cast to bf16 for DMA.
    x = f.reshape(total, C, HW).astype(io_dtype)

    # Balanced grid: >= 2 blocks so the "parallel" axis can shard across both
    # v7x TensorCores; n = cdiv keeps any partial coverage to < num_blocks
    # frames.  Partial tail blocks are handled by Pallas boundary semantics
    # (clamped input reads, masked output writes) -- no jnp.pad full copy.
    min_blocks = 2 if total > 1 else 1
    num_blocks = max(min_blocks, pl.cdiv(total, frames_per_block))
    n = pl.cdiv(total, num_blocks)
    num_blocks = pl.cdiv(total, n)                # never emit a fully-empty block

    # Hoist transposes / conv-matrix construction out of the kernel.
    w1t = w1.T.astype(jnp.float32)                # (C, hid)
    w2t = w2.T.astype(jnp.float32)                # (hid, C)
    kmat = build_conv_matrices(cw, H, W).astype(jnp.bfloat16)   # (2*HW, HW)

    def run(const_mode):
        def const_spec(shape):
            zeros = (0,) * len(shape)
            kwargs = {} if const_mode is None else {"pipeline_mode": const_mode}
            return pl.BlockSpec(shape, lambda i, z=zeros: z, **kwargs)

        grid_spec = pltpu.PrefetchScalarGridSpec(
            num_scalar_prefetch=0,
            grid=(num_blocks,),
            in_specs=[
                pl.BlockSpec((n, C, HW), lambda i: (i, 0, 0)),
                const_spec((C, hid)),
                const_spec((hid, C)),
                const_spec((2 * HW, HW)),
            ],
            out_specs=pl.BlockSpec((n, C, HW), lambda i: (i, 0, 0)),
        )
        return pl.pallas_call(
            cbam_kernel,
            out_shape=jax.ShapeDtypeStruct((total, C, HW), io_dtype),
            grid_spec=grid_spec,
            compiler_params=pltpu.CompilerParams(
                dimension_semantics=("parallel",),
                vmem_limit_bytes=vmem_limit_bytes),
        )(x, w1t, w2t, kmat)

    # Loop-invariant operands (weights, kmat) only need one VMEM buffer; fall
    # back to default (double-buffered) specs if this build rejects Buffered(1).
    try:
        out = run(pl.Buffered(buffer_count=1))
    except Exception:
        out = run(None)

    return out.reshape(B, S, C, H, W)


def cbam_ref(f, w1, w2, cw):
    """Pure-JAX reference matching the PyTorch CBAM forward."""
    B, S, C, H, W = f.shape
    outs = []
    for t in range(S):
        x = f[:, t]                                   # (B, C, H, W)
        maxp = jnp.max(x, axis=(2, 3))                # (B, C)
        avgp = jnp.mean(x, axis=(2, 3))               # (B, C)

        def mlp(v):
            return jnp.maximum(v @ w1.T, 0.0) @ w2.T

        ca = jax.nn.sigmoid(mlp(maxp) + mlp(avgp))[:, :, None, None]
        fc = ca * x
        avg_o = jnp.mean(fc, axis=1, keepdims=True)
        max_o = jnp.max(fc, axis=1, keepdims=True)
        cat = jnp.concatenate([avg_o, max_o], axis=1)  # (B, 2, H, W)
        conv = lax.conv_general_dilated(
            cat, cw[None], window_strides=(1, 1),
            padding=[(PAD, PAD), (PAD, PAD)],
            dimension_numbers=('NCHW', 'OIHW', 'NCHW'))
        sa = jax.nn.sigmoid(conv)
        outs.append(sa * fc)
    return jnp.stack(outs, axis=1)


if __name__ == "__main__":
    # Small shapes consistent with CBAM(in_channels=32), reduction_ratio=16.
    B, S, C, H, W = 2, 3, 32, 16, 16
    HID = C // 16  # = 2

    key = jax.random.PRNGKey(0)
    kf, k1, k2, kc = jax.random.split(key, 4)

    f = jax.random.normal(kf, (B, S, C, H, W), dtype=jnp.float32)
    # PyTorch Linear weights are (out, in); Conv2d weights are OIHW (O=1 squeezed).
    w1 = jax.random.normal(k1, (HID, C), dtype=jnp.float32) * 0.1   # Linear(C -> HID), no bias
    w2 = jax.random.normal(k2, (C, HID), dtype=jnp.float32) * 0.1   # Linear(HID -> C), no bias
    cw = jax.random.normal(kc, (2, KSIZE, KSIZE), dtype=jnp.float32) * 0.1  # Conv2d(2->1,7x7), no bias

    out = jax.block_until_ready(cbam_pallas(f, w1, w2, cw))
    assert out.shape == (B, S, C, H, W)

    # Kernel I/O is bf16 (per perf review), so compare against the reference on
    # the bf16-rounded input with bf16-appropriate tolerances.
    f_rt = f.astype(jnp.bfloat16).astype(jnp.float32)
    ref = jax.block_until_ready(cbam_ref(f_rt, w1, w2, cw))
    out_f32 = out.astype(jnp.float32)
    assert jnp.allclose(out_f32, ref, atol=3e-2, rtol=3e-2), \
        f"max abs err = {jnp.max(jnp.abs(out_f32 - ref))}"

    print("KERNEL_OK")
</pallas_src>

<mosaic_0001>
module attributes {stable_mosaic.version = 11 : i64} {
  func.func @cbam_kernel(%arg0: i32, %arg1: memref<3x32x256xbf16, #tpu.memory_space<vmem>>, %arg2: memref<32x2xf32, #tpu.memory_space<vmem>>, %arg3: memref<2x32xf32, #tpu.memory_space<vmem>>, %arg4: memref<512x256xbf16, #tpu.memory_space<vmem>>, %arg5: memref<3x32x256xbf16, #tpu.memory_space<vmem>>) attributes {dimension_semantics = [#tpu.dimension_semantics<parallel>], iteration_bounds = array<i64: 2>, scalar_prefetch = 0 : i64, scratch_operands = 0 : i64, tpu.core_type = #tpu.core_type<tc>, window_params = [{transform_indices = @transform_0, window_bounds = array<i64: 3, 32, 256>}, {pipeline_mode = #tpu.pipeline_mode<synchronous>, transform_indices = @transform_1, window_bounds = array<i64: 32, 2>}, {pipeline_mode = #tpu.pipeline_mode<synchronous>, transform_indices = @transform_2, window_bounds = array<i64: 2, 32>}, {pipeline_mode = #tpu.pipeline_mode<synchronous>, transform_indices = @transform_3, window_bounds = array<i64: 512, 256>}, {transform_indices = @transform_4, window_bounds = array<i64: 3, 32, 256>}]} {
    %c0 = arith.constant 0 : index
    %c0_0 = arith.constant 0 : index
    %c0_1 = arith.constant 0 : index
    %0 = vector.load %arg1[%c0, %c0_0, %c0_1] : memref<3x32x256xbf16, #tpu.memory_space<vmem>>, vector<3x32x256xbf16>
    %1 = arith.extf %0 : vector<3x32x256xbf16> to vector<3x32x256xf32>
    %cst = arith.constant dense<0xFF800000> : vector<3x32xf32>
    %2 = vector.multi_reduction <maximumf>, %1, %cst [2] : vector<3x32x256xf32> to vector<3x32xf32>
    %cst_2 = arith.constant dense<0.000000e+00> : vector<3x32xf32>
    %3 = vector.multi_reduction <add>, %1, %cst_2 [2] : vector<3x32x256xf32> to vector<3x32xf32>
    %cst_3 = arith.constant 3.906250e-03 : f32
    %4 = vector.broadcast %cst_3 : f32 to vector<3x32xf32>
    %5 = arith.mulf %3, %4 : vector<3x32xf32>
    %6 = tpu.concatenate %2, %5 in 0 : vector<3x32xf32>, vector<3x32xf32> -> vector<6x32xf32>
    %c0_4 = arith.constant 0 : index
    %c0_5 = arith.constant 0 : index
    %7 = vector.load %arg2[%c0_4, %c0_5] : memref<32x2xf32, #tpu.memory_space<vmem>>, vector<32x2xf32>
    %c0_6 = arith.constant 0 : index
    %c0_7 = arith.constant 0 : index
    %8 = vector.load %arg3[%c0_6, %c0_7] : memref<2x32xf32, #tpu.memory_space<vmem>>, vector<2x32xf32>
    %cst_8 = arith.constant dense<0.000000e+00> : vector<6x2xf32>
    %9 = tpu.matmul %6, %7, %cst_8 {dimension_numbers = #tpu.dot_dimension_numbers<[1], [0], [0], [1], [0, 0, 1, 1], [], []>} : vector<6x32xf32>, vector<32x2xf32>, vector<6x2xf32> -> vector<6x2xf32>
    %cst_9 = arith.constant 0.000000e+00 : f32
    %10 = vector.broadcast %cst_9 : f32 to vector<6x2xf32>
    %11 = arith.maximumf %9, %10 : vector<6x2xf32>
    %cst_10 = arith.constant dense<0.000000e+00> : vector<6x32xf32>
    %12 = tpu.matmul %11, %8, %cst_10 {dimension_numbers = #tpu.dot_dimension_numbers<[1], [0], [0], [1], [0, 0, 1, 1], [], []>} : vector<6x2xf32>, vector<2x32xf32>, vector<6x32xf32> -> vector<6x32xf32>
    %13 = vector.extract_strided_slice %12 {offsets = [0, 0], sizes = [3, 32], strides = [1, 1]} : vector<6x32xf32> to vector<3x32xf32>
    %14 = vector.extract_strided_slice %12 {offsets = [3, 0], sizes = [3, 32], strides = [1, 1]} : vector<6x32xf32> to vector<3x32xf32>
    %15 = arith.addf %13, %14 : vector<3x32xf32>
    %16 = arith.negf %15 : vector<3x32xf32>
    %17 = math.exp %16 : vector<3x32xf32>
    %cst_11 = arith.constant 1.000000e+00 : f32
    %18 = vector.broadcast %cst_11 : f32 to vector<3x32xf32>
    %19 = arith.addf %18, %17 : vector<3x32xf32>
    %20 = arith.divf %18, %19 : vector<3x32xf32>
    %21 = vector.shape_cast %20 : vector<3x32xf32> to vector<3x32x1xf32>
    %22 = vector.broadcast %21 : vector<3x32x1xf32> to vector<3x32x256xf32>
    %23 = arith.mulf %1, %22 : vector<3x32x256xf32>
    %cst_12 = arith.constant dense<0.000000e+00> : vector<3x256xf32>
    %24 = vector.multi_reduction <add>, %23, %cst_12 [1] : vector<3x32x256xf32> to vector<3x256xf32>
    %cst_13 = arith.constant 3.125000e-02 : f32
    %25 = vector.broadcast %cst_13 : f32 to vector<3x256xf32>
    %26 = arith.mulf %24, %25 : vector<3x256xf32>
    %cst_14 = arith.constant dense<0xFF800000> : vector<3x256xf32>
    %27 = vector.multi_reduction <maximumf>, %23, %cst_14 [1] : vector<3x32x256xf32> to vector<3x256xf32>
    %c0_15 = arith.constant 0 : index
    %c0_16 = arith.constant 0 : index
    %28 = vector.load %arg4[%c0_15, %c0_16] : memref<512x256xbf16, #tpu.memory_space<vmem>>, vector<512x256xbf16>
    %29 = tpu.concatenate %26, %27 in 1 : vector<3x256xf32>, vector<3x256xf32> -> vector<3x512xf32>
    %30 = arith.truncf %29 : vector<3x512xf32> to vector<3x512xbf16>
    %cst_17 = arith.constant dense<0.000000e+00> : vector<3x256xf32>
    %31 = tpu.matmul %30, %28, %cst_17 {dimension_numbers = #tpu.dot_dimension_numbers<[1], [0], [0], [1], [0, 0, 1, 1], [], []>} : vector<3x512xbf16>, vector<512x256xbf16>, vector<3x256xf32> -> vector<3x256xf32>
    %32 = arith.negf %31 : vector<3x256xf32>
    %33 = math.exp %32 : vector<3x256xf32>
    %cst_18 = arith.constant 1.000000e+00 : f32
    %34 = vector.broadcast %cst_18 : f32 to vector<3x256xf32>
    %35 = arith.addf %34, %33 : vector<3x256xf32>
    %36 = arith.divf %34, %35 : vector<3x256xf32>
    %37 = vector.shape_cast %36 : vector<3x256xf32> to vector<3x1x256xf32>
    %38 = vector.broadcast %37 : vector<3x1x256xf32> to vector<3x32x256xf32>
    %39 = arith.mulf %23, %38 : vector<3x32x256xf32>
    %40 = arith.truncf %39 : vector<3x32x256xf32> to vector<3x32x256xbf16>
    %c0_19 = arith.constant 0 : index
    %c0_20 = arith.constant 0 : index
    %c0_21 = arith.constant 0 : index
    %41 = vector.load %arg5[%c0_19, %c0_20, %c0_21] : memref<3x32x256xbf16, #tpu.memory_space<vmem>>, vector<3x32x256xbf16>
    tpu.vector_store %arg5[%c0_19, %c0_20, %c0_21], %40 {strides = array<i32>} : memref<3x32x256xbf16, #tpu.memory_space<vmem>>, vector<3x32x256xbf16>,
    return
  }
  func.func @transform_0(%arg0: i32) -> (i32, i32, i32) {
    %c0_i32 = arith.constant 0 : i32
    %c0_i32_0 = arith.constant 0 : i32
    %c0_i32_1 = arith.constant 0 : i32
    return %arg0, %c0_i32, %c0_i32_0 : i32, i32, i32
  }
  func.func @transform_1(%arg0: i32) -> (i32, i32) {
    %c0_i32 = arith.constant 0 : i32
    %c0_i32_0 = arith.constant 0 : i32
    %c0_i32_1 = arith.constant 0 : i32
    return %c0_i32, %c0_i32_0 : i32, i32
  }
  func.func @transform_2(%arg0: i32) -> (i32, i32) {
    %c0_i32 = arith.constant 0 : i32
    %c0_i32_0 = arith.constant 0 : i32
    %c0_i32_1 = arith.constant 0 : i32
    return %c0_i32, %c0_i32_0 : i32, i32
  }
  func.func @transform_3(%arg0: i32) -> (i32, i32) {
    %c0_i32 = arith.constant 0 : i32
    %c0_i32_0 = arith.constant 0 : i32
    %c0_i32_1 = arith.constant 0 : i32
    return %c0_i32, %c0_i32_0 : i32, i32
  }
  func.func @transform_4(%arg0: i32) -> (i32, i32, i32) {
    %c0_i32 = arith.constant 0 : i32
    %c0_i32_0 = arith.constant 0 : i32
    %c0_i32_1 = arith.constant 0 : i32
    return %arg0, %c0_i32, %c0_i32_0 : i32, i32, i32
  }
}

module attributes {stable_mosaic.version = 11 : i64} {
  func.func @cbam_kernel(%arg0: i32, %arg1: memref<3x32x256xbf16, #tpu.memory_space<vmem>>, %arg2: memref<32x2xf32, #tpu.memory_space<vmem>>, %arg3: memref<2x32xf32, #tpu.memory_space<vmem>>, %arg4: memref<512x256xbf16, #tpu.memory_space<vmem>>, %arg5: memref<3x32x256xbf16, #tpu.memory_space<vmem>>) attributes {dimension_semantics = [#tpu.dimension_semantics<parallel>], iteration_bounds = array<i64: 2>, scalar_prefetch = 0 : i64, scratch_operands = 0 : i64, tpu.core_type = #tpu.core_type<tc>, window_params = [{transform_indices = @transform_0, window_bounds = array<i64: 3, 32, 256>}, {pipeline_mode = #tpu.pipeline_mode<synchronous>, transform_indices = @transform_1, window_bounds = array<i64: 32, 2>}, {pipeline_mode = #tpu.pipeline_mode<synchronous>, transform_indices = @transform_2, window_bounds = array<i64: 2, 32>}, {pipeline_mode = #tpu.pipeline_mode<synchronous>, transform_indices = @transform_3, window_bounds = array<i64: 512, 256>}, {transform_indices = @transform_4, window_bounds = array<i64: 3, 32, 256>}]} {
    %c0 = arith.constant 0 : index
    %c0_0 = arith.constant 0 : index
    %c0_1 = arith.constant 0 : index
    %0 = vector.load %arg1[%c0, %c0_0, %c0_1] : memref<3x32x256xbf16, #tpu.memory_space<vmem>>, vector<3x32x256xbf16>
    %1 = arith.extf %0 : vector<3x32x256xbf16> to vector<3x32x256xf32>
    %cst = arith.constant dense<0xFF800000> : vector<3x32xf32>
    %2 = vector.multi_reduction <maximumf>, %1, %cst [2] : vector<3x32x256xf32> to vector<3x32xf32>
    %cst_2 = arith.constant dense<0.000000e+00> : vector<3x32xf32>
    %3 = vector.multi_reduction <add>, %1, %cst_2 [2] : vector<3x32x256xf32> to vector<3x32xf32>
    %cst_3 = arith.constant 3.906250e-03 : f32
    %4 = vector.broadcast %cst_3 : f32 to vector<3x32xf32>
    %5 = arith.mulf %3, %4 : vector<3x32xf32>
    %6 = tpu.concatenate %2, %5 in 0 : vector<3x32xf32>, vector<3x32xf32> -> vector<6x32xf32>
    %c0_4 = arith.constant 0 : index
    %c0_5 = arith.constant 0 : index
    %7 = vector.load %arg2[%c0_4, %c0_5] : memref<32x2xf32, #tpu.memory_space<vmem>>, vector<32x2xf32>
    %c0_6 = arith.constant 0 : index
    %c0_7 = arith.constant 0 : index
    %8 = vector.load %arg3[%c0_6, %c0_7] : memref<2x32xf32, #tpu.memory_space<vmem>>, vector<2x32xf32>
    %cst_8 = arith.constant dense<0.000000e+00> : vector<6x2xf32>
    %9 = tpu.matmul %6, %7, %cst_8 {dimension_numbers = #tpu.dot_dimension_numbers<[1], [0], [0], [1], [0, 0, 1, 1], [], []>} : vector<6x32xf32>, vector<32x2xf32>, vector<6x2xf32> -> vector<6x2xf32>
    %cst_9 = arith.constant 0.000000e+00 : f32
    %10 = vector.broadcast %cst_9 : f32 to vector<6x2xf32>
    %11 = arith.maximumf %9, %10 : vector<6x2xf32>
    %cst_10 = arith.constant dense<0.000000e+00> : vector<6x32xf32>
    %12 = tpu.matmul %11, %8, %cst_10 {dimension_numbers = #tpu.dot_dimension_numbers<[1], [0], [0], [1], [0, 0, 1, 1], [], []>} : vector<6x2xf32>, vector<2x32xf32>, vector<6x32xf32> -> vector<6x32xf32>
    %13 = vector.extract_strided_slice %12 {offsets = [0, 0], sizes = [3, 32], strides = [1, 1]} : vector<6x32xf32> to vector<3x32xf32>
    %14 = vector.extract_strided_slice %12 {offsets = [3, 0], sizes = [3, 32], strides = [1, 1]} : vector<6x32xf32> to vector<3x32xf32>
    %15 = arith.addf %13, %14 : vector<3x32xf32>
    %16 = arith.negf %15 : vector<3x32xf32>
    %17 = math.exp %16 : vector<3x32xf32>
    %cst_11 = arith.constant 1.000000e+00 : f32
    %18 = vector.broadcast %cst_11 : f32 to vector<3x32xf32>
    %19 = arith.addf %18, %17 : vector<3x32xf32>
    %20 = arith.divf %18, %19 : vector<3x32xf32>
    %21 = vector.shape_cast %20 : vector<3x32xf32> to vector<3x32x1xf32>
    %22 = vector.broadcast %21 : vector<3x32x1xf32> to vector<3x32x256xf32>
    %23 = arith.mulf %1, %22 : vector<3x32x256xf32>
    %cst_12 = arith.constant dense<0.000000e+00> : vector<3x256xf32>
    %24 = vector.multi_reduction <add>, %23, %cst_12 [1] : vector<3x32x256xf32> to vector<3x256xf32>
    %cst_13 = arith.constant 3.125000e-02 : f32
    %25 = vector.broadcast %cst_13 : f32 to vector<3x256xf32>
    %26 = arith.mulf %24, %25 : vector<3x256xf32>
    %cst_14 = arith.constant dense<0xFF800000> : vector<3x256xf32>
    %27 = vector.multi_reduction <maximumf>, %23, %cst_14 [1] : vector<3x32x256xf32> to vector<3x256xf32>
    %c0_15 = arith.constant 0 : index
    %c0_16 = arith.constant 0 : index
    %28 = vector.load %arg4[%c0_15, %c0_16] : memref<512x256xbf16, #tpu.memory_space<vmem>>, vector<512x256xbf16>
    %29 = tpu.concatenate %26, %27 in 1 : vector<3x256xf32>, vector<3x256xf32> -> vector<3x512xf32>
    %30 = arith.truncf %29 : vector<3x512xf32> to vector<3x512xbf16>
    %cst_17 = arith.constant dense<0.000000e+00> : vector<3x256xf32>
    %31 = tpu.matmul %30, %28, %cst_17 {dimension_numbers = #tpu.dot_dimension_numbers<[1], [0], [0], [1], [0, 0, 1, 1], [], []>} : vector<3x512xbf16>, vector<512x256xbf16>, vector<3x256xf32> -> vector<3x256xf32>
    %32 = arith.negf %31 : vector<3x256xf32>
    %33 = math.exp %32 : vector<3x256xf32>
    %cst_18 = arith.constant 1.000000e+00 : f32
    %34 = vector.broadcast %cst_18 : f32 to vector<3x256xf32>
    %35 = arith.addf %34, %33 : vector<3x256xf32>
    %36 = arith.divf %34, %35 : vector<3x256xf32>
    %37 = vector.shape_cast %36 : vector<3x256xf32> to vector<3x1x256xf32>
    %38 = vector.broadcast %37 : vector<3x1x256xf32> to vector<3x32x256xf32>
    %39 = arith.mulf %23, %38 : vector<3x32x256xf32>
    %40 = arith.truncf %39 : vector<3x32x256xf32> to vector<3x32x256xbf16>
    %c0_19 = arith.constant 0 : index
    %c0_20 = arith.constant 0 : index
    %c0_21 = arith.constant 0 : index
    %41 = vector.load %arg5[%c0_19, %c0_20, %c0_21] : memref<3x32x256xbf16, #tpu.memory_space<vmem>>, vector<3x32x256xbf16>
    tpu.vector_store %arg5[%c0_19, %c0_20, %c0_21], %40 {strides = array<i32>} : memref<3x32x256xbf16, #tpu.memory_space<vmem>>, vector<3x32x256xbf16>,
    return
  }
  func.func @transform_0(%arg0: i32) -> (i32, i32, i32) {
    %c0_i32 = arith.constant 0 : i32
    %c0_i32_0 = arith.constant 0 : i32
    %c0_i32_1 = arith.constant 0 : i32
    return %arg0, %c0_i32, %c0_i32_0 : i32, i32, i32
  }
  func.func @transform_1(%arg0: i32) -> (i32, i32) {
    %c0_i32 = arith.constant 0 : i32
    %c0_i32_0 = arith.constant 0 : i32
    %c0_i32_1 = arith.constant 0 : i32
    return %c0_i32, %c0_i32_0 : i32, i32
  }
  func.func @transform_2(%arg0: i32) -> (i32, i32) {
    %c0_i32 = arith.constant 0 : i32
    %c0_i32_0 = arith.constant 0 : i32
    %c0_i32_1 = arith.constant 0 : i32
    return %c0_i32, %c0_i32_0 : i32, i32
  }
  func.func @transform_3(%arg0: i32) -> (i32, i32) {
    %c0_i32 = arith.constant 0 : i32
    %c0_i32_0 = arith.constant 0 : i32
    %c0_i32_1 = arith.constant 0 : i32
    return %c0_i32, %c0_i32_0 : i32, i32
  }
  func.func @transform_4(%arg0: i32) -> (i32, i32, i32) {
    %c0_i32 = arith.constant 0 : i32
    %c0_i32_0 = arith.constant 0 : i32
    %c0_i32_1 = arith.constant 0 : i32
    return %arg0, %c0_i32, %c0_i32_0 : i32, i32, i32
  }
}

</mosaic_0001>

<llo_original>
// kernel: tpu_custom_call.1
$region0: #{tpu_custom_call.1}
  #allocation0 [shape = 'u32[]', space=smem, size = 0x4, offset = 0x4, fixed_abs, tag = 'smem constant byte address 0x4 - core index']
  #allocation1 [shape = 'u32[144,128]{1,0:T(1,128)}', space=vmem, size = 0x12000, scoped, tag = 'internal scratch']
  %s0 = inlined_call_operand.hbm [shape: bf16[6,32,256], index: 0, kind: input, shape index: {}]
  %s1 = inlined_call_operand.vmem [shape: f32[32,2], index: 1, kind: input, shape index: {}]
  %s2 = inlined_call_operand.vmem [shape: f32[2,32], index: 2, kind: input, shape index: {}]
  %s3 = inlined_call_operand.hbm [shape: bf16[512,256], index: 3, kind: input, shape index: {}]
  %s4 = inlined_call_operand.hbm [shape: bf16[6,32,256], index: 4, kind: output, shape index: {}]
  %s5 = sld [smem:[#allocation0]]
  $region57: #{tpu_custom_call.1} parent=0
    _
  %s7 = ssub.s32 1, %s5
  %s8 = scalar_select 0, %s7, %s5
  $region1: #{tpu_custom_call.1} parent=0
    #allocation2 [shape = 'u8[98304]{0}', space=vmem, size = 0x18000, scoped, tag = 'input window, operand 0']
    #allocation3 [shape = 's32[2]{0}', space=sflag, size = 0x8, scoped, tag = 'scoped memory for tpu_custom_call.1']
    #allocation4 [shape = 's32[2]{0}', space=sflag, size = 0x8, scoped, tag = 'scoped memory for tpu_custom_call.1']
    #allocation5 [shape = 'u8[262144]{0}', space=vmem, size = 0x40000, scoped, tag = 'input window, operand 3, single buffered']
    #allocation6 [shape = 's32[1]{0}', space=sflag, size = 0x4, scoped, tag = 'scoped memory for tpu_custom_call.1']
    #allocation7 [shape = 'u8[98304]{0}', space=vmem, size = 0x18000, scoped, tag = 'output window, operand 0']
    %9 = vsyncpa [#allocation3], 0
    %s10 = scalar_lea.sflag [#allocation3], 1
    %11 = vsyncpa %s10, 0
    %12 = vsyncpa [#allocation6], 0
    %13 = vsyncpa [#allocation4], 0
    %s14 = scalar_lea.sflag [#allocation4], 1
    %15 = vsyncpa %s14, 0
    loop: start=0, step=1, limit=4
    $region2: #{tpu_custom_call.1} parent=1 // loop_pre_header
      _
    $region3: #{tpu_custom_call.1} parent=1 // loop_header
      %s17 = sphi 0, %s21
      %p18 = scmp.ge.s32.totalorder %s17, 4
      %s27 = sphi 0, %s29
      %s30 = sphi 0, %s27
      %s31 = sphi 0, %s30
      %s47 = sphi 0, %s31
      %s51 = sphi 0, %s51
      %s53 = sphi 0, %s51
      %s54 = sphi 0, %s53
      %s68 = sphi 0, %s54
      %s72 = sphi 0, %s72
      %s74 = sphi 0, %s72
      %s75 = sphi 0, %s74
      %s89 = sphi 0, %s75
      %s93 = sphi 0, %s93
      %s95 = sphi 0, %s93
      %s96 = sphi 0, %s95
      %s110 = sphi 0, %s96
      %s116 = sphi 0, %s118
      %s119 = sphi 0, %s116
      %s120 = sphi 0, %s119
      %s136 = sphi 0, %s120
    $region4: #{tpu_custom_call.1} parent=1 // loop_header_branch
      %20 = sbr.rel (%p18) target = $region8
    $region5: #{tpu_custom_call.1} parent=1 // loop_body
      %s22 = ssub.s32 %s17, 1
      %s23 = ssub.s32 %s17, 2
      %s24 = sadd.s32 %s17, 1
      %s25 = ssub.s32 %s17, %s24
      %p26 = scmp.eq.s32.totalorder %s25, 0
      %s28 = sadd.s32 %s27, 1
      %s29 = scalar_select %p26, %s27, %s28
      %p32 = pneg %p26
      %p33 = scmp.eq.s32.totalorder %s17, 1
      %p34 = por %p32, %p33
      %p35 = scmp.ne.s32.totalorder %s27, %s30
      %p36 = scmp.eq.s32.totalorder %s17, 0
      %p37 = por %p35, %p36
      %p38 = scmp.ne.s32.totalorder %s27, %s30
      %p39 = scmp.eq.s32.totalorder %s22, 1
      %p40 = por %p38, %p39
      %p41 = scmp.ne.s32.totalorder %s30, %s31
      %p42 = scmp.eq.s32.totalorder %s22, 0
      %p43 = por %p41, %p42
      %p44 = scmp.ne.s32.totalorder %s30, %s31
      %p45 = scmp.eq.s32.totalorder %s23, 1
      %p46 = por %p44, %p45
      %p48 = scmp.ne.s32.totalorder %s31, %s47
      %p49 = scmp.eq.s32.totalorder %s23, 0
      %p50 = por %p48, %p49
      %s52 = sadd.s32 %s51, 1
      %p55 = scmp.eq.s32.totalorder %s17, 1
      %p56 = scmp.ne.s32.totalorder %s51, %s53
      %p57 = scmp.eq.s32.totalorder %s17, 0
      %p58 = por %p56, %p57
      %p59 = scmp.ne.s32.totalorder %s51, %s53
      %p60 = scmp.eq.s32.totalorder %s22, 1
      %p61 = por %p59, %p60
      %p62 = scmp.ne.s32.totalorder %s53, %s54
      %p63 = scmp.eq.s32.totalorder %s22, 0
      %p64 = por %p62, %p63
      %p65 = scmp.ne.s32.totalorder %s53, %s54
      %p66 = scmp.eq.s32.totalorder %s23, 1
      %p67 = por %p65, %p66
      %p69 = scmp.ne.s32.totalorder %s54, %s68
      %p70 = scmp.eq.s32.totalorder %s23, 0
      %p71 = por %p69, %p70
      %s73 = sadd.s32 %s72, 1
      %p76 = scmp.eq.s32.totalorder %s17, 1
      %p77 = scmp.ne.s32.totalorder %s72, %s74
      %p78 = scmp.eq.s32.totalorder %s17, 0
      %p79 = por %p77, %p78
      %p80 = scmp.ne.s32.totalorder %s72, %s74
      %p81 = scmp.eq.s32.totalorder %s22, 1
      %p82 = por %p80, %p81
      %p83 = scmp.ne.s32.totalorder %s74, %s75
      %p84 = scmp.eq.s32.totalorder %s22, 0
      %p85 = por %p83, %p84
      %p86 = scmp.ne.s32.totalorder %s74, %s75
      %p87 = scmp.eq.s32.totalorder %s23, 1
      %p88 = por %p86, %p87
      %p90 = scmp.ne.s32.totalorder %s75, %s89
      %p91 = scmp.eq.s32.totalorder %s23, 0
      %p92 = por %p90, %p91
      %s94 = sadd.s32 %s93, 1
      %p97 = scmp.eq.s32.totalorder %s17, 1
      %p98 = scmp.ne.s32.totalorder %s93, %s95
      %p99 = scmp.eq.s32.totalorder %s17, 0
      %p100 = por %p98, %p99
      %p101 = scmp.ne.s32.totalorder %s93, %s95
      %p102 = scmp.eq.s32.totalorder %s22, 1
      %p103 = por %p101, %p102
      %p104 = scmp.ne.s32.totalorder %s95, %s96
      %p105 = scmp.eq.s32.totalorder %s22, 0
      %p106 = por %p104, %p105
      %p107 = scmp.ne.s32.totalorder %s95, %s96
      %p108 = scmp.eq.s32.totalorder %s23, 1
      %p109 = por %p107, %p108
      %p111 = scmp.ne.s32.totalorder %s96, %s110
      %p112 = scmp.eq.s32.totalorder %s23, 0
      %p113 = por %p111, %p112
      %s114 = ssub.s32 %s17, %s24
      %p115 = scmp.eq.s32.totalorder %s114, 0
      %s117 = sadd.s32 %s116, 1
      %s118 = scalar_select %p115, %s116, %s117
      %p121 = pneg %p115
      %p122 = scmp.eq.s32.totalorder %s17, 1
      %p123 = por %p121, %p122
      %p124 = scmp.ne.s32.totalorder %s116, %s119
      %p125 = scmp.eq.s32.totalorder %s17, 0
      %p126 = por %p124, %p125
      %p127 = scmp.ne.s32.totalorder %s116, %s119
      %p128 = scmp.eq.s32.totalorder %s22, 1
      %p129 = por %p127, %p128
      %p130 = scmp.ne.s32.totalorder %s119, %s120
      %p131 = scmp.eq.s32.totalorder %s22, 0
      %p132 = por %p130, %p131
      %p133 = scmp.ne.s32.totalorder %s119, %s120
      %p134 = scmp.eq.s32.totalorder %s23, 1
      %p135 = por %p133, %p134
      %p137 = scmp.ne.s32.totalorder %s120, %s136
      %p138 = scmp.eq.s32.totalorder %s23, 0
      %p139 = por %p137, %p138
      %p140 = scmp.le.s32.totalorder 1, %s17
      %p141 = scmp.lt.s32.totalorder %s17, 3
      %p142 = pnand %p140, %p141
      %p143 = pneg %p142
      // Predicated region
      $region9: #{tpu_custom_call.1} parent=5 // pred_check
        _
      $region10: #{tpu_custom_call.1} parent=5 // pred_check_branch
        %145 = sbr.rel (%p142) target = $region12
      $region11: #{tpu_custom_call.1} parent=5 // pred_region
        %s146 = ssub.s32 %s17, 1
        // Predicated region
        $region13: #{tpu_custom_call.1} parent=11 // pred_check
          %p147 = pneg %p64
        $region14: #{tpu_custom_call.1} parent=11 // pred_check_branch
          %149 = sbr.rel (%p147) target = $region16
        $region15: #{tpu_custom_call.1} parent=11 // pred_region
          _
        $region16: #{tpu_custom_call.1} parent=11 // pred_fallthru
          _
        // Predicated region
        $region17: #{tpu_custom_call.1} parent=11 // pred_check
          %p150 = pneg %p85
        $region18: #{tpu_custom_call.1} parent=11 // pred_check_branch
          %152 = sbr.rel (%p150) target = $region20
        $region19: #{tpu_custom_call.1} parent=11 // pred_region
          _
        $region20: #{tpu_custom_call.1} parent=11 // pred_fallthru
          _
        // Predicated region
        $region21: #{tpu_custom_call.1} parent=11 // pred_check
          %p153 = pneg %p106
        $region22: #{tpu_custom_call.1} parent=11 // pred_check_branch
          %155 = sbr.rel (%p153) target = $region24
        $region23: #{tpu_custom_call.1} parent=11 // pred_region
          %s157 = ssub.s32 8192, 8192
          %158 = vsyncadd [#allocation6], %s157
          %s159 = sshll.u32 [#allocation5], 4
          %s160 = int_to_ptr.vmem [resolvable:$true] %s159
          %165 = dma.hbm_to_vmem [thread:$0]  %s3, 8192, %s160, [#allocation6], 128, 128, 8
        $region24: #{tpu_custom_call.1} parent=11 // pred_fallthru
          _
      $region12: #{tpu_custom_call.1} parent=5 // pred_fallthru
        _
      %p166 = scmp.lt.s32.totalorder %s17, 2
      // Predicated region
      $region25: #{tpu_custom_call.1} parent=5 // pred_check
        %p167 = pneg %p166
      $region26: #{tpu_custom_call.1} parent=5 // pred_check_branch
        %169 = sbr.rel (%p167) target = $region28
      $region27: #{tpu_custom_call.1} parent=5 // pred_region
        // Predicated region
        $region29: #{tpu_custom_call.1} parent=27 // pred_check
          %p170 = pneg %p37
        $region30: #{tpu_custom_call.1} parent=27 // pred_check_branch
          %172 = sbr.rel (%p170) target = $region32
        $region31: #{tpu_custom_call.1} parent=27 // pred_region
          %s173 = sand.u32 %s27, 1
          %s174 = scalar_lea.sflag [#allocation3], %s173
          %s175 = sand.u32 %s27, 1
          %s176 = smul.addr %s175, 96
          %s177 = scalar_lea.vmem [#allocation2], %s176
          %s178 = smul.u32 3, %s17
          %s180 = ssub.s32 1536, 1536
          %181 = vsyncadd %s174, %s180
          %s182 = smul.addr %s178, 8
          %s183 = smul.addr %s182, 64
          %s184 = scalar_lea.hbm %s0, %s183
          %s185 = sshll.u32 %s177, 4
          %s186 = int_to_ptr.vmem [resolvable:$true] %s185
          %191 = dma.hbm_to_vmem [thread:$0]  %s184, 1536, %s186, %s174, 128, 128, 8
        $region32: #{tpu_custom_call.1} parent=27 // pred_fallthru
          _
      $region28: #{tpu_custom_call.1} parent=5 // pred_fallthru
        _
      %p192 = scmp.le.s32.totalorder 1, %s17
      %p193 = scmp.lt.s32.totalorder %s17, 3
      %p194 = pnand %p192, %p193
      %p195 = pneg %p194
      // Predicated region
      $region33: #{tpu_custom_call.1} parent=5 // pred_check
        _
      $region34: #{tpu_custom_call.1} parent=5 // pred_check_branch
        %197 = sbr.rel (%p194) target = $region36
      $region35: #{tpu_custom_call.1} parent=5 // pred_region
        %s198 = ssub.s32 %s17, 1
        %s199 = sand.u32 %s30, 1
        %s200 = scalar_lea.sflag [#allocation3], %s199
        %s201 = sand.u32 %s30, 1
        %s202 = smul.addr %s201, 96
        %s203 = scalar_lea.vmem [#allocation2], %s202
        // Predicated region
        $region37: #{tpu_custom_call.1} parent=35 // pred_check
          %p204 = pneg %p43
        $region38: #{tpu_custom_call.1} parent=35 // pred_check_branch
          %206 = sbr.rel (%p204) target = $region40
        $region39: #{tpu_custom_call.1} parent=35 // pred_region
          %207 = dma.done %s200, 1536
        $region40: #{tpu_custom_call.1} parent=35 // pred_fallthru
          _
        // Predicated region
        $region41: #{tpu_custom_call.1} parent=35 // pred_check
          %p208 = pneg %p106
        $region42: #{tpu_custom_call.1} parent=35 // pred_check_branch
          %210 = sbr.rel (%p208) target = $region44
        $region43: #{tpu_custom_call.1} parent=35 // pred_region
          %211 = dma.done [#allocation6], 8192
        $region44: #{tpu_custom_call.1} parent=35 // pred_fallthru
          _
        %s212 = sand.u32 %s30, 1
        %s213 = scalar_lea.sflag [#allocation3], %s212
        %s214 = sand.u32 %s30, 1
        %s215 = smul.addr %s214, 96
        %s216 = scalar_lea.vmem [#allocation2], %s215
        %p217 = pneg %p43
        %p218 = pneg %p40
        %p219 = pneg %p64
        %p220 = pneg %p61
        %p221 = pneg %p85
        %p222 = pneg %p82
        %p223 = pneg %p106
        %p224 = pneg %p103
        %p225 = pneg %p132
        %p226 = pneg %p129
        %s227 = sand.u32 %s119, 1
        %s228 = scalar_lea.sflag [#allocation4], %s227
        %s229 = sand.u32 %s119, 1
        %s230 = smul.addr %s229, 96
        %s231 = scalar_lea.vmem [#allocation7], %s230
        %s232 = smul.u32 3, %s22
        %s233 = smul.u32 3, %s22
        %v234 = vld [vmem:[%s203] sm:$0xff]
        %v235 = vld [vmem:[%s203 + $0x8] sm:$0xff]
        %v236 = vld [vmem:[%s203 + $0x10] sm:$0xff]
        %v237 = vld [vmem:[%s203 + $0x18] sm:$0xff]
        %v238 = vld [vmem:[%s203 + $0x20] sm:$0xff]
        %v239 = vld [vmem:[%s203 + $0x28] sm:$0xff]
        %v240 = vld [vmem:[%s203 + $0x30] sm:$0xff]
        %v241 = vld [vmem:[%s203 + $0x38] sm:$0xff]
        %v242 = vld [vmem:[%s203 + $0x40] sm:$0xff]
        %v243 = vld [vmem:[%s203 + $0x48] sm:$0xff]
        %v244 = vld [vmem:[%s203 + $0x50] sm:$0xff]
        %v245 = vld [vmem:[%s203 + $0x58] sm:$0xff]
        %v246 = vunpack.c.l.bf16 %v234
        %v247 = vunpack.c.h.bf16 %v234
        %v248 = vunpack.c.l.bf16 %v235
        %v249 = vunpack.c.h.bf16 %v235
        %v250 = vunpack.c.l.bf16 %v236
        %v251 = vunpack.c.h.bf16 %v236
        %v252 = vunpack.c.l.bf16 %v237
        %v253 = vunpack.c.h.bf16 %v237
        %v254 = vunpack.c.l.bf16 %v238
        %v255 = vunpack.c.h.bf16 %v238
        %v256 = vunpack.c.l.bf16 %v239
        %v257 = vunpack.c.h.bf16 %v239
        %v258 = vunpack.c.l.bf16 %v240
        %v259 = vunpack.c.h.bf16 %v240
        %v260 = vunpack.c.l.bf16 %v241
        %v261 = vunpack.c.h.bf16 %v241
        %v262 = vunpack.c.l.bf16 %v242
        %v263 = vunpack.c.h.bf16 %v242
        %v264 = vunpack.c.l.bf16 %v243
        %v265 = vunpack.c.h.bf16 %v243
        %v266 = vunpack.c.l.bf16 %v244
        %v267 = vunpack.c.h.bf16 %v244
        %v268 = vunpack.c.l.bf16 %v245
        %v269 = vunpack.c.h.bf16 %v245
        %v270 = vmax.f32 %v246, %v247
        %271 = vmax.xlane.f32.xlu0 %v270
        %v272 = vpop.xlane.xlu0 %271
        %v273 = vmax.f32 %v248, %v249
        %274 = vmax.xlane.f32.xlu0 %v273
        %v275 = vpop.xlane.xlu0 %274
        %v276 = vmax.f32 %v250, %v251
        %277 = vmax.xlane.f32.xlu0 %v276
        %v278 = vpop.xlane.xlu0 %277
        %v279 = vmax.f32 %v252, %v253
        %280 = vmax.xlane.f32.xlu0 %v279
        %v281 = vpop.xlane.xlu0 %280
        %v282 = vmax.f32 %v254, %v255
        %283 = vmax.xlane.f32.xlu0 %v282
        %v284 = vpop.xlane.xlu0 %283
        %v285 = vmax.f32 %v256, %v257
        %286 = vmax.xlane.f32.xlu0 %v285
        %v287 = vpop.xlane.xlu0 %286
        %v288 = vmax.f32 %v258, %v259
        %289 = vmax.xlane.f32.xlu0 %v288
        %v290 = vpop.xlane.xlu0 %289
        %v291 = vmax.f32 %v260, %v261
        %292 = vmax.xlane.f32.xlu0 %v291
        %v293 = vpop.xlane.xlu0 %292
        %v294 = vmax.f32 %v262, %v263
        %295 = vmax.xlane.f32.xlu0 %v294
        %v296 = vpop.xlane.xlu0 %295
        %v297 = vmax.f32 %v264, %v265
        %298 = vmax.xlane.f32.xlu0 %v297
        %v299 = vpop.xlane.xlu0 %298
        %v300 = vmax.f32 %v266, %v267
        %301 = vmax.xlane.f32.xlu0 %v300
        %v302 = vpop.xlane.xlu0 %301
        %v303 = vmax.f32 %v268, %v269
        %304 = vmax.xlane.f32.xlu0 %v303
        %v305 = vpop.xlane.xlu0 %304
        %v306 = vadd.f32 %v246, %v247
        %307 = vadd.xlane.f32.xlu0 %v306
        %v308 = vpop.xlane.xlu0 %307
        %v309 = vadd.f32 %v248, %v249
        %310 = vadd.xlane.f32.xlu0 %v309
        %v311 = vpop.xlane.xlu0 %310
        %v312 = vadd.f32 %v250, %v251
        %313 = vadd.xlane.f32.xlu0 %v312
        %v314 = vpop.xlane.xlu0 %313
        %v315 = vadd.f32 %v252, %v253
        %316 = vadd.xlane.f32.xlu0 %v315
        %v317 = vpop.xlane.xlu0 %316
        %v318 = vadd.f32 %v254, %v255
        %319 = vadd.xlane.f32.xlu0 %v318
        %v320 = vpop.xlane.xlu0 %319
        %v321 = vadd.f32 %v256, %v257
        %322 = vadd.xlane.f32.xlu0 %v321
        %v323 = vpop.xlane.xlu0 %322
        %v324 = vadd.f32 %v258, %v259
        %325 = vadd.xlane.f32.xlu0 %v324
        %v326 = vpop.xlane.xlu0 %325
        %v327 = vadd.f32 %v260, %v261
        %328 = vadd.xlane.f32.xlu0 %v327
        %v329 = vpop.xlane.xlu0 %328
        %v330 = vadd.f32 %v262, %v263
        %331 = vadd.xlane.f32.xlu0 %v330
        %v332 = vpop.xlane.xlu0 %331
        %v333 = vadd.f32 %v264, %v265
        %334 = vadd.xlane.f32.xlu0 %v333
        %v335 = vpop.xlane.xlu0 %334
        %v336 = vadd.f32 %v266, %v267
        %337 = vadd.xlane.f32.xlu0 %v336
        %v338 = vpop.xlane.xlu0 %337
        %v339 = vadd.f32 %v268, %v269
        %340 = vadd.xlane.f32.xlu0 %v339
        %v341 = vpop.xlane.xlu0 %340
        %v342 = vmul.f32 %v308, 0.00390625
        %v343 = vmul.f32 %v311, 0.00390625
        %v344 = vmul.f32 %v314, 0.00390625
        %v345 = vmul.f32 %v317, 0.00390625
        %v346 = vmul.f32 %v320, 0.00390625
        %v347 = vmul.f32 %v323, 0.00390625
        %v348 = vmul.f32 %v326, 0.00390625
        %v349 = vmul.f32 %v329, 0.00390625
        %v350 = vmul.f32 %v332, 0.00390625
        %v351 = vmul.f32 %v335, 0.00390625
        %v352 = vmul.f32 %v338, 0.00390625
        %v353 = vmul.f32 %v341, 0.00390625
        %v366 = vlaneseq
        %v367 = vand.u32 %v366, 127
        %v368 = vlaneseq
        %v369 = vshrl.u32 %v368, 7
        %v370 = vsub.s32 %v367, %v369
        %v371 = vrot.slane %v272, %v370
        %v372 = vadd.s32 %v367, 4294967288
        %v373 = vlaneseq
        %v374 = vshrl.u32 %v373, 7
        %v375 = vsub.s32 %v372, %v374
        %v376 = vrot.slane %v275, %v375
        %vm377 = vcmask 130112
        %v378 = vsel %vm377, %v376, %v371
        %v379 = vadd.s32 %v367, 4294967280
        %v380 = vlaneseq
        %v381 = vshrl.u32 %v380, 7
        %v382 = vsub.s32 %v379, %v381
        %v383 = vrot.slane %v278, %v382
        %vm384 = vcmask 195712
        %v385 = vsel %vm384, %v383, %v378
        %v386 = vadd.s32 %v367, 4294967272
        %v387 = vlaneseq
        %v388 = vshrl.u32 %v387, 7
        %v389 = vsub.s32 %v386, %v388
        %v390 = vrot.slane %v281, %v389
        %vm391 = vcmask 261312
        %v392 = vsel %vm391, %v390, %v385
        %v393 = vlaneseq
        %v394 = vshrl.u32 %v393, 7
        %v395 = vsub.s32 %v367, %v394
        %v396 = vrot.slane %v284, %v395
        %v397 = vlaneseq
        %v398 = vshrl.u32 %v397, 7
        %v399 = vsub.s32 %v372, %v398
        %v400 = vrot.slane %v287, %v399
        %v401 = vsel %vm377, %v400, %v396
        %v402 = vlaneseq
        %v403 = vshrl.u32 %v402, 7
        %v404 = vsub.s32 %v379, %v403
        %v405 = vrot.slane %v290, %v404
        %v406 = vsel %vm384, %v405, %v401
        %v407 = vlaneseq
        %v408 = vshrl.u32 %v407, 7
        %v409 = vsub.s32 %v386, %v408
        %v410 = vrot.slane %v293, %v409
        %v411 = vsel %vm391, %v410, %v406
        %v412 = vlaneseq
        %v413 = vshrl.u32 %v412, 7
        %v414 = vsub.s32 %v367, %v413
        %v415 = vrot.slane %v296, %v414
        %v416 = vlaneseq
        %v417 = vshrl.u32 %v416, 7
        %v418 = vsub.s32 %v372, %v417
        %v419 = vrot.slane %v299, %v418
        %v420 = vsel %vm377, %v419, %v415
        %v421 = vlaneseq
        %v422 = vshrl.u32 %v421, 7
        %v423 = vsub.s32 %v379, %v422
        %v424 = vrot.slane %v302, %v423
        %v425 = vsel %vm384, %v424, %v420
        %v426 = vlaneseq
        %v427 = vshrl.u32 %v426, 7
        %v428 = vsub.s32 %v386, %v427
        %v429 = vrot.slane %v305, %v428
        %v430 = vsel %vm391, %v429, %v425
        %vm431 = vcmask 1041409
        %v432 = vsel %vm431, %v411, %v392
        %vm433 = vcmask 1042434
        %v434 = vsel %vm433, %v430, %v432
        %v448 = vlaneseq
        %v449 = vshrl.u32 %v448, 7
        %v450 = vsub.s32 %v367, %v449
        %v451 = vrot.slane %v342, %v450
        %v452 = vlaneseq
        %v453 = vshrl.u32 %v452, 7
        %v454 = vsub.s32 %v372, %v453
        %v455 = vrot.slane %v343, %v454
        %v456 = vsel %vm377, %v455, %v451
        %v457 = vlaneseq
        %v458 = vshrl.u32 %v457, 7
        %v459 = vsub.s32 %v379, %v458
        %v460 = vrot.slane %v344, %v459
        %v461 = vsel %vm384, %v460, %v456
        %v462 = vlaneseq
        %v463 = vshrl.u32 %v462, 7
        %v464 = vsub.s32 %v386, %v463
        %v465 = vrot.slane %v345, %v464
        %v466 = vsel %vm391, %v465, %v461
        %v467 = vlaneseq
        %v468 = vshrl.u32 %v467, 7
        %v469 = vsub.s32 %v367, %v468
        %v470 = vrot.slane %v346, %v469
        %v471 = vlaneseq
        %v472 = vshrl.u32 %v471, 7
        %v473 = vsub.s32 %v372, %v472
        %v474 = vrot.slane %v347, %v473
        %v475 = vsel %vm377, %v474, %v470
        %v476 = vlaneseq
        %v477 = vshrl.u32 %v476, 7
        %v478 = vsub.s32 %v379, %v477
        %v479 = vrot.slane %v348, %v478
        %v480 = vsel %vm384, %v479, %v475
        %v481 = vlaneseq
        %v482 = vshrl.u32 %v481, 7
        %v483 = vsub.s32 %v386, %v482
        %v484 = vrot.slane %v349, %v483
        %v485 = vsel %vm391, %v484, %v480
        %v486 = vlaneseq
        %v487 = vshrl.u32 %v486, 7
        %v488 = vsub.s32 %v367, %v487
        %v489 = vrot.slane %v350, %v488
        %v490 = vlaneseq
        %v491 = vshrl.u32 %v490, 7
        %v492 = vsub.s32 %v372, %v491
        %v493 = vrot.slane %v351, %v492
        %v494 = vsel %vm377, %v493, %v489
        %v495 = vlaneseq
        %v496 = vshrl.u32 %v495, 7
        %v497 = vsub.s32 %v379, %v496
        %v498 = vrot.slane %v352, %v497
        %v499 = vsel %vm384, %v498, %v494
        %v500 = vlaneseq
        %v501 = vshrl.u32 %v500, 7
        %v502 = vsub.s32 %v386, %v501
        %v503 = vrot.slane %v353, %v502
        %v504 = vsel %vm391, %v503, %v499
        %vm505 = vcmask 1044484
        %v506 = vsel %vm505, %v485, %v466
        %vm507 = vcmask 1045509
        %v508 = vsel %vm507, %v504, %v506
        %vm510 = vcmask 1042432
        %v511 = vsel %vm510, %v434, %v508
        %v512 = vld [vmem:[%s1] sm:$0xff]
        %v513 = vld [vmem:[%s1 + $0x8] sm:$0xff]
        %v514 = vld [vmem:[%s1 + $0x10] sm:$0xff]
        %v515 = vld [vmem:[%s1 + $0x18] sm:$0xff]
        %v516 = vld [vmem:[%s2] sm:$0x3]
        %vm517 = vcmask 261120
        %v519 = vsel %vm517, %v511, 0
        %521 = vmatprep.subr.mxu0 0.0
        %522 = vmatpush1.msra.mxu0 %v512
        %523 = vmatprep.subr.mxu0 0.0
        %524 = vmatpush1.msra.mxu0 %v513
        %525 = vmatprep.subr.mxu0 0.0
        %526 = vmatpush1.msra.mxu0 %v514
        %527 = vmatprep.subr.mxu0 0.0
        %528 = vmatpush1.msra.mxu0 %v515
        %529 = vmatprep.subr.mxu0 0.0
        %530 = vmatpush1.msra.mxu0 0.0
        %531 = vmatprep.subr.mxu0 0.0
        %532 = vmatpush1.msra.mxu0 0.0
        %533 = vmatprep.subr.mxu0 0.0
        %534 = vmatpush1.msra.mxu0 0.0
        %535 = vmatprep.subr.mxu0 0.0
        %536 = vmatpush1.msra.mxu0 0.0
        %537 = vmatprep.subr.mxu0 0.0
        %538 = vmatpush1.msra.mxu0 0.0
        %539 = vmatprep.subr.mxu0 0.0
        %540 = vmatpush1.msra.mxu0 0.0
        %541 = vmatprep.subr.mxu0 0.0
        %542 = vmatpush1.msra.mxu0 0.0
        %543 = vmatprep.subr.mxu0 0.0
        %544 = vmatpush1.msra.mxu0 0.0
        %545 = vmatprep.subr.mxu0 0.0
        %546 = vmatpush1.msra.mxu0 0.0
        %547 = vmatprep.subr.mxu0 0.0
        %548 = vmatpush1.msra.mxu0 0.0
        %549 = vmatprep.subr.mxu0 0.0
        %550 = vmatpush1.msra.mxu0 0.0
        %551 = vmatprep.subr.mxu0 0.0
        %552 = vmatpush1.msra.mxu0 0.0
        %553 = vmatprep.subr.mxu0 0.0
        %554 = vmatpush1.msra.mxu0 0.0
        %555 = vmatprep.subr.mxu0 0.0
        %556 = vmatpush1.msra.mxu0 0.0
        %557 = vmatprep.subr.mxu0 0.0
        %558 = vmatpush1.msra.mxu0 0.0
        %559 = vmatprep.subr.mxu0 0.0
        %560 = vmatpush1.msra.mxu0 0.0
        %561 = vmatprep.subr.mxu0 0.0
        %562 = vmatpush1.msra.mxu0 0.0
        %563 = vmatprep.subr.mxu0 0.0
        %564 = vmatpush1.msra.mxu0 0.0
        %565 = vmatprep.subr.mxu0 0.0
        %566 = vmatpush1.msra.mxu0 0.0
        %567 = vmatprep.subr.mxu0 0.0
        %568 = vmatpush1.msra.mxu0 0.0
        %569 = vmatprep.subr.mxu0 0.0
        %570 = vmatpush1.msra.mxu0 0.0
        %571 = vmatprep.subr.mxu0 0.0
        %572 = vmatpush1.msra.mxu0 0.0
        %573 = vmatprep.subr.mxu0 0.0
        %574 = vmatpush1.msra.mxu0 0.0
        %575 = vmatprep.subr.mxu0 0.0
        %576 = vmatpush1.msra.mxu0 0.0
        %577 = vmatprep.subr.mxu0 0.0
        %578 = vmatpush1.msra.mxu0 0.0
        %579 = vmatprep.subr.mxu0 0.0
        %580 = vmatpush1.msra.mxu0 0.0
        %581 = vmatprep.subr.mxu0 0.0
        %582 = vmatpush1.msra.mxu0 0.0
        %583 = vmatprep.subr.mxu0 0.0
        %584 = vmatpush1.msra.mxu0 0.0
        %585 = vmatprep.mubr.f32.mxu0 0.0
        %586 = vmatmul.mubr.f32.gmra.mrb[0].mxu0 %v519
        %v587 = vpop.f32.mrb[0].mxu0
        %v588 = vadd.f32 0.0, %v587
        %v589 = vpop.f32.mrb[0].mxu0
        %590 = vdwg.mxu0
        %v591 = vmax.f32 %v588, 0.0
        %vm592 = vcmask 15360
        %v594 = vsel %vm592, %v591, 0
        %vm596 = vcmask 1041408
        %v598 = vsel %vm596, %v516, 0
        %600 = vmatprep.subr.mxu0 0.0
        %601 = vmatpush1.msra.mxu0 %v598
        %602 = vmatprep.subr.mxu0 0.0
        %603 = vmatpush1.msra.mxu0 0.0
        %604 = vmatprep.subr.mxu0 0.0
        %605 = vmatpush1.msra.mxu0 0.0
        %606 = vmatprep.subr.mxu0 0.0
        %607 = vmatpush1.msra.mxu0 0.0
        %608 = vmatprep.subr.mxu0 0.0
        %609 = vmatpush1.msra.mxu0 0.0
        %610 = vmatprep.subr.mxu0 0.0
        %611 = vmatpush1.msra.mxu0 0.0
        %612 = vmatprep.subr.mxu0 0.0
        %613 = vmatpush1.msra.mxu0 0.0
        %614 = vmatprep.subr.mxu0 0.0
        %615 = vmatpush1.msra.mxu0 0.0
        %616 = vmatprep.subr.mxu0 0.0
        %617 = vmatpush1.msra.mxu0 0.0
        %618 = vmatprep.subr.mxu0 0.0
        %619 = vmatpush1.msra.mxu0 0.0
        %620 = vmatprep.subr.mxu0 0.0
        %621 = vmatpush1.msra.mxu0 0.0
        %622 = vmatprep.subr.mxu0 0.0
        %623 = vmatpush1.msra.mxu0 0.0
        %624 = vmatprep.subr.mxu0 0.0
        %625 = vmatpush1.msra.mxu0 0.0
        %626 = vmatprep.subr.mxu0 0.0
        %627 = vmatpush1.msra.mxu0 0.0
        %628 = vmatprep.subr.mxu0 0.0
        %629 = vmatpush1.msra.mxu0 0.0
        %630 = vmatprep.subr.mxu0 0.0
        %631 = vmatpush1.msra.mxu0 0.0
        %632 = vmatprep.subr.mxu0 0.0
        %633 = vmatpush1.msra.mxu0 0.0
        %634 = vmatprep.subr.mxu0 0.0
        %635 = vmatpush1.msra.mxu0 0.0
        %636 = vmatprep.subr.mxu0 0.0
        %637 = vmatpush1.msra.mxu0 0.0
        %638 = vmatprep.subr.mxu0 0.0
        %639 = vmatpush1.msra.mxu0 0.0
        %640 = vmatprep.subr.mxu0 0.0
        %641 = vmatpush1.msra.mxu0 0.0
        %642 = vmatprep.subr.mxu0 0.0
        %643 = vmatpush1.msra.mxu0 0.0
        %644 = vmatprep.subr.mxu0 0.0
        %645 = vmatpush1.msra.mxu0 0.0
        %646 = vmatprep.subr.mxu0 0.0
        %647 = vmatpush1.msra.mxu0 0.0
        %648 = vmatprep.subr.mxu0 0.0
        %649 = vmatpush1.msra.mxu0 0.0
        %650 = vmatprep.subr.mxu0 0.0
        %651 = vmatpush1.msra.mxu0 0.0
        %652 = vmatprep.subr.mxu0 0.0
        %653 = vmatpush1.msra.mxu0 0.0
        %654 = vmatprep.subr.mxu0 0.0
        %655 = vmatpush1.msra.mxu0 0.0
        %656 = vmatprep.subr.mxu0 0.0
        %657 = vmatpush1.msra.mxu0 0.0
        %658 = vmatprep.subr.mxu0 0.0
        %659 = vmatpush1.msra.mxu0 0.0
        %660 = vmatprep.subr.mxu0 0.0
        %661 = vmatpush1.msra.mxu0 0.0
        %662 = vmatprep.subr.mxu0 0.0
        %663 = vmatpush1.msra.mxu0 0.0
        %664 = vmatprep.mubr.f32.mxu0 0.0
        %665 = vmatmul.mubr.f32.gmra.mrb[0].mxu0 %v594
        %v666 = vpop.f32.mrb[0].mxu0
        %v667 = vadd.f32 0.0, %v666
        %v668 = vpop.f32.mrb[0].mxu0
        %669 = vdwg.mxu0
        %v671 = vrot.slane %v667, 3
        %v673 = vadd.f32 %v667, %v671
        %v674 = vxor.u32 %v673, 2147483648
        %v675 = vmul.f32 %v674, 1.442695
        %v676 = vpow.pop %v675
        %v677 = vadd.f32 %v676, 1.0
        %v678 = vrcp.pop %v677
        %v679 = vmul.f32 1.0, %v678
        %v680 = vlaneseq
        %v681 = vshrl.u32 %v680, 7
        %v682 = vsub.s32 0, %v681
        %v683 = vrot.slane %v679, %v682
        %685 = vbcast.lane.b32.xlu0 %v683, 256
        %v686 = vpop.permute.xlu0 %685
        %s688 = sor.u32 256, 8
        %689 = vbcast.lane.b32.xlu0 %v683, %s688
        %v690 = vpop.permute.xlu0 %689
        %s692 = sor.u32 256, 16
        %693 = vbcast.lane.b32.xlu0 %v683, %s692
        %v694 = vpop.permute.xlu0 %693
        %s696 = sor.u32 256, 24
        %697 = vbcast.lane.b32.xlu0 %v683, %s696
        %v698 = vpop.permute.xlu0 %697
        %v699 = vlaneseq
        %v700 = vshrl.u32 %v699, 7
        %v701 = vsub.s32 1, %v700
        %v702 = vrot.slane %v679, %v701
        %704 = vbcast.lane.b32.xlu0 %v702, 256
        %v705 = vpop.permute.xlu0 %704
        %s707 = sor.u32 256, 8
        %708 = vbcast.lane.b32.xlu0 %v702, %s707
        %v709 = vpop.permute.xlu0 %708
        %s711 = sor.u32 256, 16
        %712 = vbcast.lane.b32.xlu0 %v702, %s711
        %v713 = vpop.permute.xlu0 %712
        %s715 = sor.u32 256, 24
        %716 = vbcast.lane.b32.xlu0 %v702, %s715
        %v717 = vpop.permute.xlu0 %716
        %v718 = vlaneseq
        %v719 = vshrl.u32 %v718, 7
        %v720 = vsub.s32 2, %v719
        %v721 = vrot.slane %v679, %v720
        %723 = vbcast.lane.b32.xlu0 %v721, 256
        %v724 = vpop.permute.xlu0 %723
        %s726 = sor.u32 256, 8
        %727 = vbcast.lane.b32.xlu0 %v721, %s726
        %v728 = vpop.permute.xlu0 %727
        %s730 = sor.u32 256, 16
        %731 = vbcast.lane.b32.xlu0 %v721, %s730
        %v732 = vpop.permute.xlu0 %731
        %s734 = sor.u32 256, 24
        %735 = vbcast.lane.b32.xlu0 %v721, %s734
        %v736 = vpop.permute.xlu0 %735
        %v737 = vmul.f32 %v246, %v686
        %v738 = vmul.f32 %v247, %v686
        %v739 = vmul.f32 %v248, %v690
        %v740 = vmul.f32 %v249, %v690
        %v741 = vmul.f32 %v250, %v694
        %v742 = vmul.f32 %v251, %v694
        %v743 = vmul.f32 %v252, %v698
        %v744 = vmul.f32 %v253, %v698
        %v745 = vmul.f32 %v254, %v705
        %v746 = vmul.f32 %v255, %v705
        %v747 = vmul.f32 %v256, %v709
        %v748 = vmul.f32 %v257, %v709
        %v749 = vmul.f32 %v258, %v713
        %v750 = vmul.f32 %v259, %v713
        %v751 = vmul.f32 %v260, %v717
        %v752 = vmul.f32 %v261, %v717
        %v753 = vmul.f32 %v262, %v724
        %v754 = vmul.f32 %v263, %v724
        %v755 = vmul.f32 %v264, %v728
        %v756 = vmul.f32 %v265, %v728
        %v757 = vmul.f32 %v266, %v732
        %v758 = vmul.f32 %v267, %v732
        %v759 = vmul.f32 %v268, %v736
        %v760 = vmul.f32 %v269, %v736
        %v761 = vadd.f32 %v737, %v739
        %v762 = vadd.f32 %v761, %v741
        %v763 = vadd.f32 %v762, %v743
        %v764 = vrot.slane %v763, 4
        %v765 = vadd.f32 %v763, %v764
        %v766 = vrot.slane %v765, 2
        %v767 = vadd.f32 %v765, %v766
        %v768 = vrot.slane %v767, 1
        %v769 = vadd.f32 %v767, %v768
        %v770 = vadd.f32 %v738, %v740
        %v771 = vadd.f32 %v770, %v742
        %v772 = vadd.f32 %v771, %v744
        %v773 = vrot.slane %v772, 4
        %v774 = vadd.f32 %v772, %v773
        %v775 = vrot.slane %v774, 2
        %v776 = vadd.f32 %v774, %v775
        %v777 = vrot.slane %v776, 1
        %v778 = vadd.f32 %v776, %v777
        %v779 = vadd.f32 %v745, %v747
        %v780 = vadd.f32 %v779, %v749
        %v781 = vadd.f32 %v780, %v751
        %v782 = vrot.slane %v781, 4
        %v783 = vadd.f32 %v781, %v782
        %v784 = vrot.slane %v783, 2
        %v785 = vadd.f32 %v783, %v784
        %v786 = vrot.slane %v785, 1
        %v787 = vadd.f32 %v785, %v786
        %v788 = vadd.f32 %v746, %v748
        %v789 = vadd.f32 %v788, %v750
        %v790 = vadd.f32 %v789, %v752
        %v791 = vrot.slane %v790, 4
        %v792 = vadd.f32 %v790, %v791
        %v793 = vrot.slane %v792, 2
        %v794 = vadd.f32 %v792, %v793
        %v795 = vrot.slane %v794, 1
        %v796 = vadd.f32 %v794, %v795
        %v797 = vadd.f32 %v753, %v755
        %v798 = vadd.f32 %v797, %v757
        %v799 = vadd.f32 %v798, %v759
        %v800 = vrot.slane %v799, 4
        %v801 = vadd.f32 %v799, %v800
        %v802 = vrot.slane %v801, 2
        %v803 = vadd.f32 %v801, %v802
        %v804 = vrot.slane %v803, 1
        %v805 = vadd.f32 %v803, %v804
        %v806 = vadd.f32 %v754, %v756
        %v807 = vadd.f32 %v806, %v758
        %v808 = vadd.f32 %v807, %v760
        %v809 = vrot.slane %v808, 4
        %v810 = vadd.f32 %v808, %v809
        %v811 = vrot.slane %v810, 2
        %v812 = vadd.f32 %v810, %v811
        %v813 = vrot.slane %v812, 1
        %v814 = vadd.f32 %v812, %v813
        %v815 = vmul.f32 %v769, 0.03125
        %v816 = vmul.f32 %v778, 0.03125
        %v817 = vmul.f32 %v787, 0.03125
        %v818 = vmul.f32 %v796, 0.03125
        %v819 = vmul.f32 %v805, 0.03125
        %v820 = vmul.f32 %v814, 0.03125
        %v821 = vmax.f32 %v737, %v739
        %v822 = vmax.f32 %v821, %v741
        %v823 = vmax.f32 %v822, %v743
        %v824 = vrot.slane %v823, 4
        %v825 = vmax.f32 %v823, %v824
        %v826 = vrot.slane %v825, 2
        %v827 = vmax.f32 %v825, %v826
        %v828 = vrot.slane %v827, 1
        %v829 = vmax.f32 %v827, %v828
        %v830 = vmax.f32 %v738, %v740
        %v831 = vmax.f32 %v830, %v742
        %v832 = vmax.f32 %v831, %v744
        %v833 = vrot.slane %v832, 4
        %v834 = vmax.f32 %v832, %v833
        %v835 = vrot.slane %v834, 2
        %v836 = vmax.f32 %v834, %v835
        %v837 = vrot.slane %v836, 1
        %v838 = vmax.f32 %v836, %v837
        %v839 = vmax.f32 %v745, %v747
        %v840 = vmax.f32 %v839, %v749
        %v841 = vmax.f32 %v840, %v751
        %v842 = vrot.slane %v841, 4
        %v843 = vmax.f32 %v841, %v842
        %v844 = vrot.slane %v843, 2
        %v845 = vmax.f32 %v843, %v844
        %v846 = vrot.slane %v845, 1
        %v847 = vmax.f32 %v845, %v846
        %v848 = vmax.f32 %v746, %v748
        %v849 = vmax.f32 %v848, %v750
        %v850 = vmax.f32 %v849, %v752
        %v851 = vrot.slane %v850, 4
        %v852 = vmax.f32 %v850, %v851
        %v853 = vrot.slane %v852, 2
        %v854 = vmax.f32 %v852, %v853
        %v855 = vrot.slane %v854, 1
        %v856 = vmax.f32 %v854, %v855
        %v857 = vmax.f32 %v753, %v755
        %v858 = vmax.f32 %v857, %v757
        %v859 = vmax.f32 %v858, %v759
        %v860 = vrot.slane %v859, 4
        %v861 = vmax.f32 %v859, %v860
        %v862 = vrot.slane %v861, 2
        %v863 = vmax.f32 %v861, %v862
        %v864 = vrot.slane %v863, 1
        %v865 = vmax.f32 %v863, %v864
        %v866 = vmax.f32 %v754, %v756
        %v867 = vmax.f32 %v866, %v758
        %v868 = vmax.f32 %v867, %v760
        %v869 = vrot.slane %v868, 4
        %v870 = vmax.f32 %v868, %v869
        %v871 = vrot.slane %v870, 2
        %v872 = vmax.f32 %v870, %v871
        %v873 = vrot.slane %v872, 1
        %v874 = vmax.f32 %v872, %v873
        %v875 = vld [vmem:[#allocation5] sm:$0xff]
        %v876 = vld [vmem:[#allocation5 + $0x8] sm:$0xff]
        %v877 = vld [vmem:[#allocation5 + $0x10] sm:$0xff]
        %v878 = vld [vmem:[#allocation5 + $0x18] sm:$0xff]
        %v879 = vld [vmem:[#allocation5 + $0x20] sm:$0xff]
        %v880 = vld [vmem:[#allocation5 + $0x28] sm:$0xff]
        %v881 = vld [vmem:[#allocation5 + $0x30] sm:$0xff]
        %v882 = vld [vmem:[#allocation5 + $0x38] sm:$0xff]
        %v883 = vld [vmem:[#allocation5 + $0x40] sm:$0xff]
        %v884 = vld [vmem:[#allocation5 + $0x48] sm:$0xff]
        %v885 = vld [vmem:[#allocation5 + $0x50] sm:$0xff]
        %v886 = vld [vmem:[#allocation5 + $0x58] sm:$0xff]
        %v887 = vld [vmem:[#allocation5 + $0x60] sm:$0xff]
        %v888 = vld [vmem:[#allocation5 + $0x68] sm:$0xff]
        %v889 = vld [vmem:[#allocation5 + $0x70] sm:$0xff]
        %v890 = vld [vmem:[#allocation5 + $0x78] sm:$0xff]
        %v891 = vld [vmem:[#allocation5 + $0x80] sm:$0xff]
        %v892 = vld [vmem:[#allocation5 + $0x88] sm:$0xff]
        %v893 = vld [vmem:[#allocation5 + $0x90] sm:$0xff]
        %v894 = vld [vmem:[#allocation5 + $0x98] sm:$0xff]
        %v895 = vld [vmem:[#allocation5 + $0xa0] sm:$0xff]
        %v896 = vld [vmem:[#allocation5 + $0xa8] sm:$0xff]
        %v897 = vld [vmem:[#allocation5 + $0xb0] sm:$0xff]
        %v898 = vld [vmem:[#allocation5 + $0xb8] sm:$0xff]
        %v899 = vld [vmem:[#allocation5 + $0xc0] sm:$0xff]
        %v900 = vld [vmem:[#allocation5 + $0xc8] sm:$0xff]
        %v901 = vld [vmem:[#allocation5 + $0xd0] sm:$0xff]
        %v902 = vld [vmem:[#allocation5 + $0xd8] sm:$0xff]
        %v903 = vld [vmem:[#allocation5 + $0xe0] sm:$0xff]
        %v904 = vld [vmem:[#allocation5 + $0xe8] sm:$0xff]
        %v905 = vld [vmem:[#allocation5 + $0xf0] sm:$0xff]
        %v906 = vld [vmem:[#allocation5 + $0xf8] sm:$0xff]
        %v907 = vld [vmem:[#allocation5 + $0x100] sm:$0xff]
        %v908 = vld [vmem:[#allocation5 + $0x108] sm:$0xff]
        %v909 = vld [vmem:[#allocation5 + $0x110] sm:$0xff]
        %v910 = vld [vmem:[#allocation5 + $0x118] sm:$0xff]
        %v911 = vld [vmem:[#allocation5 + $0x120] sm:$0xff]
        %v912 = vld [vmem:[#allocation5 + $0x128] sm:$0xff]
        %v913 = vld [vmem:[#allocation5 + $0x130] sm:$0xff]
        %v914 = vld [vmem:[#allocation5 + $0x138] sm:$0xff]
        %v915 = vld [vmem:[#allocation5 + $0x140] sm:$0xff]
        %v916 = vld [vmem:[#allocation5 + $0x148] sm:$0xff]
        %v917 = vld [vmem:[#allocation5 + $0x150] sm:$0xff]
        %v918 = vld [vmem:[#allocation5 + $0x158] sm:$0xff]
        %v919 = vld [vmem:[#allocation5 + $0x160] sm:$0xff]
        %v920 = vld [vmem:[#allocation5 + $0x168] sm:$0xff]
        %v921 = vld [vmem:[#allocation5 + $0x170] sm:$0xff]
        %v922 = vld [vmem:[#allocation5 + $0x178] sm:$0xff]
        %v923 = vld [vmem:[#allocation5 + $0x180] sm:$0xff]
        %v924 = vld [vmem:[#allocation5 + $0x188] sm:$0xff]
        %v925 = vld [vmem:[#allocation5 + $0x190] sm:$0xff]
        %v926 = vld [vmem:[#allocation5 + $0x198] sm:$0xff]
        %v927 = vld [vmem:[#allocation5 + $0x1a0] sm:$0xff]
        %v928 = vld [vmem:[#allocation5 + $0x1a8] sm:$0xff]
        %v929 = vld [vmem:[#allocation5 + $0x1b0] sm:$0xff]
        %v930 = vld [vmem:[#allocation5 + $0x1b8] sm:$0xff]
        %v931 = vld [vmem:[#allocation5 + $0x1c0] sm:$0xff]
        %v932 = vld [vmem:[#allocation5 + $0x1c8] sm:$0xff]
        %v933 = vld [vmem:[#allocation5 + $0x1d0] sm:$0xff]
        %v934 = vld [vmem:[#allocation5 + $0x1d8] sm:$0xff]
        %v935 = vld [vmem:[#allocation5 + $0x1e0] sm:$0xff]
        %v936 = vld [vmem:[#allocation5 + $0x1e8] sm:$0xff]
        %v937 = vld [vmem:[#allocation5 + $0x1f0] sm:$0xff]
        %v938 = vld [vmem:[#allocation5 + $0x1f8] sm:$0xff]
        %v945 = vsel %vm431, %v817, %v815
        %v946 = vsel %vm433, %v819, %v945
        %v947 = vsel %vm431, %v818, %v816
        %v948 = vsel %vm433, %v820, %v947
        %v957 = vsel %vm431, %v847, %v829
        %v958 = vsel %vm433, %v865, %v957
        %v959 = vsel %vm431, %v856, %v838
        %v960 = vsel %vm433, %v874, %v959
        %v963 = vpack.c.bf16 %v946, %v946
        %v964 = vpack.c.bf16 %v948, %v948
        %v965 = vpack.c.bf16 %v958, %v958
        %v966 = vpack.c.bf16 %v960, %v960
        %v1031 = vunpack.c.l.b16 %v875
        %v1032 = vunpack.c.h.b16 %v875
        %v1033 = vunpack.c.l.b16 %v876
        %v1034 = vunpack.c.h.b16 %v876
        %v1035 = vunpack.c.l.b16 %v877
        %v1036 = vunpack.c.h.b16 %v877
        %v1037 = vunpack.c.l.b16 %v878
        %v1038 = vunpack.c.h.b16 %v878
        %v1039 = vunpack.c.l.b16 %v879
        %v1040 = vunpack.c.h.b16 %v879
        %v1041 = vunpack.c.l.b16 %v880
        %v1042 = vunpack.c.h.b16 %v880
        %v1043 = vunpack.c.l.b16 %v881
        %v1044 = vunpack.c.h.b16 %v881
        %v1045 = vunpack.c.l.b16 %v882
        %v1046 = vunpack.c.h.b16 %v882
        %v1047 = vunpack.c.l.b16 %v883
        %v1048 = vunpack.c.h.b16 %v883
        %v1049 = vunpack.c.l.b16 %v884
        %v1050 = vunpack.c.h.b16 %v884
        %v1051 = vunpack.c.l.b16 %v885
        %v1052 = vunpack.c.h.b16 %v885
        %v1053 = vunpack.c.l.b16 %v886
        %v1054 = vunpack.c.h.b16 %v886
        %v1055 = vunpack.c.l.b16 %v887
        %v1056 = vunpack.c.h.b16 %v887
        %v1057 = vunpack.c.l.b16 %v888
        %v1058 = vunpack.c.h.b16 %v888
        %v1059 = vunpack.c.l.b16 %v889
        %v1060 = vunpack.c.h.b16 %v889
        %v1061 = vunpack.c.l.b16 %v890
        %v1062 = vunpack.c.h.b16 %v890
        %v1063 = vunpack.c.l.b16 %v891
        %v1064 = vunpack.c.h.b16 %v891
        %v1065 = vunpack.c.l.b16 %v892
        %v1066 = vunpack.c.h.b16 %v892
        %v1067 = vunpack.c.l.b16 %v893
        %v1068 = vunpack.c.h.b16 %v893
        %v1069 = vunpack.c.l.b16 %v894
        %v1070 = vunpack.c.h.b16 %v894
        %v1071 = vunpack.c.l.b16 %v895
        %v1072 = vunpack.c.h.b16 %v895
        %v1073 = vunpack.c.l.b16 %v896
        %v1074 = vunpack.c.h.b16 %v896
        %v1075 = vunpack.c.l.b16 %v897
        %v1076 = vunpack.c.h.b16 %v897
        %v1077 = vunpack.c.l.b16 %v898
        %v1078 = vunpack.c.h.b16 %v898
        %v1079 = vunpack.c.l.b16 %v899
        %v1080 = vunpack.c.h.b16 %v899
        %v1081 = vunpack.c.l.b16 %v900
        %v1082 = vunpack.c.h.b16 %v900
        %v1083 = vunpack.c.l.b16 %v901
        %v1084 = vunpack.c.h.b16 %v901
        %v1085 = vunpack.c.l.b16 %v902
        %v1086 = vunpack.c.h.b16 %v902
        %v1087 = vunpack.c.l.b16 %v903
        %v1088 = vunpack.c.h.b16 %v903
        %v1089 = vunpack.c.l.b16 %v904
        %v1090 = vunpack.c.h.b16 %v904
        %v1091 = vunpack.c.l.b16 %v905
        %v1092 = vunpack.c.h.b16 %v905
        %v1093 = vunpack.c.l.b16 %v906
        %v1094 = vunpack.c.h.b16 %v906
        %v1095 = vunpack.c.l.b16 %v907
        %v1096 = vunpack.c.h.b16 %v907
        %v1097 = vunpack.c.l.b16 %v908
        %v1098 = vunpack.c.h.b16 %v908
        %v1099 = vunpack.c.l.b16 %v909
        %v1100 = vunpack.c.h.b16 %v909
        %v1101 = vunpack.c.l.b16 %v910
        %v1102 = vunpack.c.h.b16 %v910
        %v1103 = vunpack.c.l.b16 %v911
        %v1104 = vunpack.c.h.b16 %v911
        %v1105 = vunpack.c.l.b16 %v912
        %v1106 = vunpack.c.h.b16 %v912
        %v1107 = vunpack.c.l.b16 %v913
        %v1108 = vunpack.c.h.b16 %v913
        %v1109 = vunpack.c.l.b16 %v914
        %v1110 = vunpack.c.h.b16 %v914
        %v1111 = vunpack.c.l.b16 %v915
        %v1112 = vunpack.c.h.b16 %v915
        %v1113 = vunpack.c.l.b16 %v916
        %v1114 = vunpack.c.h.b16 %v916
        %v1115 = vunpack.c.l.b16 %v917
        %v1116 = vunpack.c.h.b16 %v917
        %v1117 = vunpack.c.l.b16 %v918
        %v1118 = vunpack.c.h.b16 %v918
        %v1119 = vunpack.c.l.b16 %v919
        %v1120 = vunpack.c.h.b16 %v919
        %v1121 = vunpack.c.l.b16 %v920
        %v1122 = vunpack.c.h.b16 %v920
        %v1123 = vunpack.c.l.b16 %v921
        %v1124 = vunpack.c.h.b16 %v921
        %v1125 = vunpack.c.l.b16 %v922
        %v1126 = vunpack.c.h.b16 %v922
        %v1127 = vunpack.c.l.b16 %v923
        %v1128 = vunpack.c.h.b16 %v923
        %v1129 = vunpack.c.l.b16 %v924
        %v1130 = vunpack.c.h.b16 %v924
        %v1131 = vunpack.c.l.b16 %v925
        %v1132 = vunpack.c.h.b16 %v925
        %v1133 = vunpack.c.l.b16 %v926
        %v1134 = vunpack.c.h.b16 %v926
        %v1135 = vunpack.c.l.b16 %v927
        %v1136 = vunpack.c.h.b16 %v927
        %v1137 = vunpack.c.l.b16 %v928
        %v1138 = vunpack.c.h.b16 %v928
        %v1139 = vunpack.c.l.b16 %v929
        %v1140 = vunpack.c.h.b16 %v929
        %v1141 = vunpack.c.l.b16 %v930
        %v1142 = vunpack.c.h.b16 %v930
        %v1143 = vunpack.c.l.b16 %v931
        %v1144 = vunpack.c.h.b16 %v931
        %v1145 = vunpack.c.l.b16 %v932
        %v1146 = vunpack.c.h.b16 %v932
        %v1147 = vunpack.c.l.b16 %v933
        %v1148 = vunpack.c.h.b16 %v933
        %v1149 = vunpack.c.l.b16 %v934
        %v1150 = vunpack.c.h.b16 %v934
        %v1151 = vunpack.c.l.b16 %v935
        %v1152 = vunpack.c.h.b16 %v935
        %v1153 = vunpack.c.l.b16 %v936
        %v1154 = vunpack.c.h.b16 %v936
        %v1155 = vunpack.c.l.b16 %v937
        %v1156 = vunpack.c.h.b16 %v937
        %v1157 = vunpack.c.l.b16 %v938
        %v1158 = vunpack.c.h.b16 %v938
        %v1159 = vpack.c.b16 %v1033, %v1031
        %v1160 = vpack.c.b16 %v1034, %v1032
        %v1161 = vpack.c.b16 %v1037, %v1035
        %v1162 = vpack.c.b16 %v1038, %v1036
        %v1163 = vpack.c.b16 %v1041, %v1039
        %v1164 = vpack.c.b16 %v1042, %v1040
        %v1165 = vpack.c.b16 %v1045, %v1043
        %v1166 = vpack.c.b16 %v1046, %v1044
        %v1167 = vpack.c.b16 %v1049, %v1047
        %v1168 = vpack.c.b16 %v1050, %v1048
        %v1169 = vpack.c.b16 %v1053, %v1051
        %v1170 = vpack.c.b16 %v1054, %v1052
        %v1171 = vpack.c.b16 %v1057, %v1055
        %v1172 = vpack.c.b16 %v1058, %v1056
        %v1173 = vpack.c.b16 %v1061, %v1059
        %v1174 = vpack.c.b16 %v1062, %v1060
        %v1175 = vpack.c.b16 %v1065, %v1063
        %v1176 = vpack.c.b16 %v1066, %v1064
        %v1177 = vpack.c.b16 %v1069, %v1067
        %v1178 = vpack.c.b16 %v1070, %v1068
        %v1179 = vpack.c.b16 %v1073, %v1071
        %v1180 = vpack.c.b16 %v1074, %v1072
        %v1181 = vpack.c.b16 %v1077, %v1075
        %v1182 = vpack.c.b16 %v1078, %v1076
        %v1183 = vpack.c.b16 %v1081, %v1079
        %v1184 = vpack.c.b16 %v1082, %v1080
        %v1185 = vpack.c.b16 %v1085, %v1083
        %v1186 = vpack.c.b16 %v1086, %v1084
        %v1187 = vpack.c.b16 %v1089, %v1087
        %v1188 = vpack.c.b16 %v1090, %v1088
        %v1189 = vpack.c.b16 %v1093, %v1091
        %v1190 = vpack.c.b16 %v1094, %v1092
        %v1191 = vpack.c.b16 %v1097, %v1095
        %v1192 = vpack.c.b16 %v1098, %v1096
        %v1193 = vpack.c.b16 %v1101, %v1099
        %v1194 = vpack.c.b16 %v1102, %v1100
        %v1195 = vpack.c.b16 %v1105, %v1103
        %v1196 = vpack.c.b16 %v1106, %v1104
        %v1197 = vpack.c.b16 %v1109, %v1107
        %v1198 = vpack.c.b16 %v1110, %v1108
        %v1199 = vpack.c.b16 %v1113, %v1111
        %v1200 = vpack.c.b16 %v1114, %v1112
        %v1201 = vpack.c.b16 %v1117, %v1115
        %v1202 = vpack.c.b16 %v1118, %v1116
        %v1203 = vpack.c.b16 %v1121, %v1119
        %v1204 = vpack.c.b16 %v1122, %v1120
        %v1205 = vpack.c.b16 %v1125, %v1123
        %v1206 = vpack.c.b16 %v1126, %v1124
        %v1207 = vpack.c.b16 %v1129, %v1127
        %v1208 = vpack.c.b16 %v1130, %v1128
        %v1209 = vpack.c.b16 %v1133, %v1131
        %v1210 = vpack.c.b16 %v1134, %v1132
        %v1211 = vpack.c.b16 %v1137, %v1135
        %v1212 = vpack.c.b16 %v1138, %v1136
        %v1213 = vpack.c.b16 %v1141, %v1139
        %v1214 = vpack.c.b16 %v1142, %v1140
        %v1215 = vpack.c.b16 %v1145, %v1143
        %v1216 = vpack.c.b16 %v1146, %v1144
        %v1217 = vpack.c.b16 %v1149, %v1147
        %v1218 = vpack.c.b16 %v1150, %v1148
        %v1219 = vpack.c.b16 %v1153, %v1151
        %v1220 = vpack.c.b16 %v1154, %v1152
        %v1221 = vpack.c.b16 %v1157, %v1155
        %v1222 = vpack.c.b16 %v1158, %v1156
        %1287 = vmatprep.subr.bf16.mxu0 %v1160
        %1288 = vmatpush1.bf16.msra.mxu0 %v1159
        %1289 = vmatprep.subr.bf16.mxu0 %v1162
        %1290 = vmatpush1.bf16.msra.mxu0 %v1161
        %1291 = vmatprep.subr.bf16.mxu0 %v1164
        %1292 = vmatpush1.bf16.msra.mxu0 %v1163
        %1293 = vmatprep.subr.bf16.mxu0 %v1166
        %1294 = vmatpush1.bf16.msra.mxu0 %v1165
        %1295 = vmatprep.subr.bf16.mxu0 %v1168
        %1296 = vmatpush1.bf16.msra.mxu0 %v1167
        %1297 = vmatprep.subr.bf16.mxu0 %v1170
        %1298 = vmatpush1.bf16.msra.mxu0 %v1169
        %1299 = vmatprep.subr.bf16.mxu0 %v1172
        %1300 = vmatpush1.bf16.msra.mxu0 %v1171
        %1301 = vmatprep.subr.bf16.mxu0 %v1174
        %1302 = vmatpush1.bf16.msra.mxu0 %v1173
        %1303 = vmatprep.subr.bf16.mxu0 %v1176
        %1304 = vmatpush1.bf16.msra.mxu0 %v1175
        %1305 = vmatprep.subr.bf16.mxu0 %v1178
        %1306 = vmatpush1.bf16.msra.mxu0 %v1177
        %1307 = vmatprep.subr.bf16.mxu0 %v1180
        %1308 = vmatpush1.bf16.msra.mxu0 %v1179
        %1309 = vmatprep.subr.bf16.mxu0 %v1182
        %1310 = vmatpush1.bf16.msra.mxu0 %v1181
        %1311 = vmatprep.subr.bf16.mxu0 %v1184
        %1312 = vmatpush1.bf16.msra.mxu0 %v1183
        %1313 = vmatprep.subr.bf16.mxu0 %v1186
        %1314 = vmatpush1.bf16.msra.mxu0 %v1185
        %1315 = vmatprep.subr.bf16.mxu0 %v1188
        %1316 = vmatpush1.bf16.msra.mxu0 %v1187
        %1317 = vmatprep.subr.bf16.mxu0 %v1190
        %1318 = vmatpush1.bf16.msra.mxu0 %v1189
        %1319 = vmatprep.mubr.bf16.mxu0 %v964
        %1320 = vmatmul.mubr.bf16.gmra.mrb[0].mxu0 %v963
        %v1321 = vpop.f32.mrb[0].mxu0
        %v1322 = vadd.f32 0.0, %v1321
        %v1323 = vpop.f32.mrb[0].mxu0
        %v1324 = vadd.f32 0.0, %v1323
        %v1325 = vpop.f32.mrb[0].mxu0
        %v1326 = vpop.f32.mrb[0].mxu0
        %1327 = vdwg.mxu0
        %1328 = vmatprep.subr.bf16.mxu0 %v1192
        %1329 = vmatpush1.bf16.msra.mxu0 %v1191
        %1330 = vmatprep.subr.bf16.mxu0 %v1194
        %1331 = vmatpush1.bf16.msra.mxu0 %v1193
        %1332 = vmatprep.subr.bf16.mxu0 %v1196
        %1333 = vmatpush1.bf16.msra.mxu0 %v1195
        %1334 = vmatprep.subr.bf16.mxu0 %v1198
        %1335 = vmatpush1.bf16.msra.mxu0 %v1197
        %1336 = vmatprep.subr.bf16.mxu0 %v1200
        %1337 = vmatpush1.bf16.msra.mxu0 %v1199
        %1338 = vmatprep.subr.bf16.mxu0 %v1202
        %1339 = vmatpush1.bf16.msra.mxu0 %v1201
        %1340 = vmatprep.subr.bf16.mxu0 %v1204
        %1341 = vmatpush1.bf16.msra.mxu0 %v1203
        %1342 = vmatprep.subr.bf16.mxu0 %v1206
        %1343 = vmatpush1.bf16.msra.mxu0 %v1205
        %1344 = vmatprep.subr.bf16.mxu0 %v1208
        %1345 = vmatpush1.bf16.msra.mxu0 %v1207
        %1346 = vmatprep.subr.bf16.mxu0 %v1210
        %1347 = vmatpush1.bf16.msra.mxu0 %v1209
        %1348 = vmatprep.subr.bf16.mxu0 %v1212
        %1349 = vmatpush1.bf16.msra.mxu0 %v1211
        %1350 = vmatprep.subr.bf16.mxu0 %v1214
        %1351 = vmatpush1.bf16.msra.mxu0 %v1213
        %1352 = vmatprep.subr.bf16.mxu0 %v1216
        %1353 = vmatpush1.bf16.msra.mxu0 %v1215
        %1354 = vmatprep.subr.bf16.mxu0 %v1218
        %1355 = vmatpush1.bf16.msra.mxu0 %v1217
        %1356 = vmatprep.subr.bf16.mxu0 %v1220
        %1357 = vmatpush1.bf16.msra.mxu0 %v1219
        %1358 = vmatprep.subr.bf16.mxu0 %v1222
        %1359 = vmatpush1.bf16.msra.mxu0 %v1221
        %1360 = vmatprep.mubr.bf16.mxu0 %v966
        %1361 = vmatmul.mubr.bf16.gmra.mrb[0].mxu0 %v965
        %v1362 = vpop.f32.mrb[0].mxu0
        %v1363 = vadd.f32 %v1322, %v1362
        %v1364 = vpop.f32.mrb[0].mxu0
        %v1365 = vadd.f32 %v1324, %v1364
        %v1366 = vpop.f32.mrb[0].mxu0
        %v1367 = vpop.f32.mrb[0].mxu0
        %1368 = vdwg.mxu0
        %v1369 = vxor.u32 %v1363, 2147483648
        %v1370 = vxor.u32 %v1365, 2147483648
        %v1371 = vmul.f32 %v1369, 1.442695
        %v1372 = vpow.pop %v1371
        %v1373 = vmul.f32 %v1370, 1.442695
        %v1374 = vpow.pop %v1373
        %v1375 = vadd.f32 %v1372, 1.0
        %v1376 = vadd.f32 %v1374, 1.0
        %v1377 = vrcp.pop %v1375
        %v1378 = vmul.f32 1.0, %v1377
        %v1379 = vrcp.pop %v1376
        %v1380 = vmul.f32 1.0, %v1379
        %v1383 = vcombine.low %v1378, %v1380
        %v1385 = vunpack.c.l.s4 1966171168
        %v1386 = vunpack.c.0.s8 %v1385
        %v1387 = vlaneseq
        %v1388 = vshrl.u32 %v1387, 7
        %v1389 = vsub.s32 %v1386, %v1388
        %v1390 = vrot.slane %v1383, %v1389
        %v1391 = vcombine.high %v1390, %v1390
        %v1393 = vunpack.c.l.s4 1966171168
        %v1394 = vunpack.c.0.s8 %v1393
        %v1395 = vlaneseq
        %v1396 = vshrl.u32 %v1395, 7
        %v1397 = vsub.s32 %v1394, %v1396
        %v1398 = vrot.slane %v1390, %v1397
        %v1400 = vunpack.c.l.s4 1966171168
        %v1401 = vunpack.c.0.s8 %v1400
        %v1402 = vlaneseq
        %v1403 = vshrl.u32 %v1402, 7
        %v1404 = vsub.s32 %v1401, %v1403
        %v1405 = vrot.slane %v1391, %v1404
        %v1406 = vcombine.high %v1398, %v1398
        %v1407 = vlaneseq
        %v1408 = vshrl.u32 %v1407, 7
        %v1409 = vsub.s32 0, %v1408
        %v1410 = vrot.slane %v1398, %v1409
        %v1411 = vlaneseq
        %v1412 = vshrl.u32 %v1411, 7
        %v1413 = vsub.s32 1, %v1412
        %v1414 = vrot.slane %v1398, %v1413
        %v1415 = vlaneseq
        %v1416 = vshrl.u32 %v1415, 7
        %v1417 = vsub.s32 0, %v1416
        %v1418 = vrot.slane %v1405, %v1417
        %v1419 = vlaneseq
        %v1420 = vshrl.u32 %v1419, 7
        %v1421 = vsub.s32 1, %v1420
        %v1422 = vrot.slane %v1405, %v1421
        %v1423 = vlaneseq
        %v1424 = vshrl.u32 %v1423, 7
        %v1425 = vsub.s32 0, %v1424
        %v1426 = vrot.slane %v1406, %v1425
        %v1427 = vlaneseq
        %v1428 = vshrl.u32 %v1427, 7
        %v1429 = vsub.s32 1, %v1428
        %v1430 = vrot.slane %v1406, %v1429
        %v1437 = vmul.f32 %v737, %v1410
        %v1438 = vmul.f32 %v738, %v1414
        %v1439 = vmul.f32 %v739, %v1410
        %v1440 = vmul.f32 %v740, %v1414
        %v1441 = vmul.f32 %v741, %v1410
        %v1442 = vmul.f32 %v742, %v1414
        %v1443 = vmul.f32 %v743, %v1410
        %v1444 = vmul.f32 %v744, %v1414
        %v1445 = vmul.f32 %v745, %v1418
        %v1446 = vmul.f32 %v746, %v1422
        %v1447 = vmul.f32 %v747, %v1418
        %v1448 = vmul.f32 %v748, %v1422
        %v1449 = vmul.f32 %v749, %v1418
        %v1450 = vmul.f32 %v750, %v1422
        %v1451 = vmul.f32 %v751, %v1418
        %v1452 = vmul.f32 %v752, %v1422
        %v1453 = vmul.f32 %v753, %v1426
        %v1454 = vmul.f32 %v754, %v1430
        %v1455 = vmul.f32 %v755, %v1426
        %v1456 = vmul.f32 %v756, %v1430
        %v1457 = vmul.f32 %v757, %v1426
        %v1458 = vmul.f32 %v758, %v1430
        %v1459 = vmul.f32 %v759, %v1426
        %v1460 = vmul.f32 %v760, %v1430
        %v1461 = vpack.c.bf16 %v1439, %v1437
        %v1462 = vpack.c.bf16 %v1440, %v1438
        %v1463 = vpack.c.bf16 %v1443, %v1441
        %v1464 = vpack.c.bf16 %v1444, %v1442
        %v1465 = vpack.c.bf16 %v1447, %v1445
        %v1466 = vpack.c.bf16 %v1448, %v1446
        %v1467 = vpack.c.bf16 %v1451, %v1449
        %v1468 = vpack.c.bf16 %v1452, %v1450
        %v1469 = vpack.c.bf16 %v1455, %v1453
        %v1470 = vpack.c.bf16 %v1456, %v1454
        %v1471 = vpack.c.bf16 %v1459, %v1457
        %v1472 = vpack.c.bf16 %v1460, %v1458
        %v1485 = vunpack.c.l.b16 %v1461
        %v1486 = vunpack.c.l.b16 %v1462
        %v1487 = vunpack.c.h.b16 %v1461
        %v1488 = vunpack.c.h.b16 %v1462
        %v1489 = vunpack.c.l.b16 %v1463
        %v1490 = vunpack.c.l.b16 %v1464
        %v1491 = vunpack.c.h.b16 %v1463
        %v1492 = vunpack.c.h.b16 %v1464
        %v1493 = vunpack.c.l.b16 %v1465
        %v1494 = vunpack.c.l.b16 %v1466
        %v1495 = vunpack.c.h.b16 %v1465
        %v1496 = vunpack.c.h.b16 %v1466
        %v1497 = vunpack.c.l.b16 %v1467
        %v1498 = vunpack.c.l.b16 %v1468
        %v1499 = vunpack.c.h.b16 %v1467
        %v1500 = vunpack.c.h.b16 %v1468
        %v1501 = vunpack.c.l.b16 %v1469
        %v1502 = vunpack.c.l.b16 %v1470
        %v1503 = vunpack.c.h.b16 %v1469
        %v1504 = vunpack.c.h.b16 %v1470
        %v1505 = vunpack.c.l.b16 %v1471
        %v1506 = vunpack.c.l.b16 %v1472
        %v1507 = vunpack.c.h.b16 %v1471
        %v1508 = vunpack.c.h.b16 %v1472
        %v1509 = vpack.c.b16 %v1486, %v1485
        %v1510 = vpack.c.b16 %v1488, %v1487
        %v1511 = vpack.c.b16 %v1490, %v1489
        %v1512 = vpack.c.b16 %v1492, %v1491
        %v1513 = vpack.c.b16 %v1494, %v1493
        %v1514 = vpack.c.b16 %v1496, %v1495
        %v1515 = vpack.c.b16 %v1498, %v1497
        %v1516 = vpack.c.b16 %v1500, %v1499
        %v1517 = vpack.c.b16 %v1502, %v1501
        %v1518 = vpack.c.b16 %v1504, %v1503
        %v1519 = vpack.c.b16 %v1506, %v1505
        %v1520 = vpack.c.b16 %v1508, %v1507
        %1533 = vst [vmem:[%s231] sm:$0xff] %v1509
        %1534 = vst [vmem:[%s231 + $0x8] sm:$0xff] %v1510
        %1535 = vst [vmem:[%s231 + $0x10] sm:$0xff] %v1511
        %1536 = vst [vmem:[%s231 + $0x18] sm:$0xff] %v1512
        %1537 = vst [vmem:[%s231 + $0x20] sm:$0xff] %v1513
        %1538 = vst [vmem:[%s231 + $0x28] sm:$0xff] %v1514
        %1539 = vst [vmem:[%s231 + $0x30] sm:$0xff] %v1515
        %1540 = vst [vmem:[%s231 + $0x38] sm:$0xff] %v1516
        %1541 = vst [vmem:[%s231 + $0x40] sm:$0xff] %v1517
        %1542 = vst [vmem:[%s231 + $0x48] sm:$0xff] %v1518
        %1543 = vst [vmem:[%s231 + $0x50] sm:$0xff] %v1519
        %1544 = vst [vmem:[%s231 + $0x58] sm:$0xff] %v1520
        %s1545 = sand.u32 %s119, 1
        %s1546 = scalar_lea.sflag [#allocation4], %s1545
        %s1547 = sand.u32 %s119, 1
        %s1548 = smul.addr %s1547, 96
        %s1549 = scalar_lea.vmem [#allocation7], %s1548
        // Predicated region
        $region45: #{tpu_custom_call.1} parent=35 // pred_check
          %p1550 = pneg %p129
        $region46: #{tpu_custom_call.1} parent=35 // pred_check_branch
          %1552 = sbr.rel (%p1550) target = $region48
        $region47: #{tpu_custom_call.1} parent=35 // pred_region
          %s1553 = smul.u32 3, %s22
          %s1555 = ssub.s32 1536, 1536
          %1556 = vsyncadd %s1546, %s1555
          %s1557 = smul.addr %s1553, 8
          %s1558 = smul.addr %s1557, 64
          %s1559 = scalar_lea.hbm %s4, %s1558
          %s1560 = sshll.u32 %s1549, 4
          %s1561 = int_to_ptr.vmem [resolvable:$true] %s1560
          %1566 = dma.vmem_to_hbm [thread:$0]  %s1561, 1536, %s1559, %s1546, 128, 128, 8
        $region48: #{tpu_custom_call.1} parent=35 // pred_fallthru
          _
      $region36: #{tpu_custom_call.1} parent=5 // pred_fallthru
        _
      %p1567 = scmp.le.s32.totalorder 2, %s17
      // Predicated region
      $region49: #{tpu_custom_call.1} parent=5 // pred_check
        %p1568 = pneg %p1567
      $region50: #{tpu_custom_call.1} parent=5 // pred_check_branch
        %1570 = sbr.rel (%p1568) target = $region52
      $region51: #{tpu_custom_call.1} parent=5 // pred_region
        %s1571 = ssub.s32 %s17, 2
        // Predicated region
        $region53: #{tpu_custom_call.1} parent=51 // pred_check
          %p1572 = pneg %p135
        $region54: #{tpu_custom_call.1} parent=51 // pred_check_branch
          %1574 = sbr.rel (%p1572) target = $region56
        $region55: #{tpu_custom_call.1} parent=51 // pred_region
          %s1575 = sand.u32 %s120, 1
          %s1576 = scalar_lea.sflag [#allocation4], %s1575
          %s1577 = sand.u32 %s120, 1
          %s1578 = smul.addr %s1577, 96
          %s1579 = scalar_lea.vmem [#allocation7], %s1578
          %1580 = dma.done %s1576, 1536
        $region56: #{tpu_custom_call.1} parent=51 // pred_fallthru
          _
      $region52: #{tpu_custom_call.1} parent=5 // pred_fallthru
        _
    $region6: #{tpu_custom_call.1} parent=1 // loop_footer
      %s21 = sadd.s32 1, %s17
    $region7: #{tpu_custom_call.1} parent=1 // loop_footer_branch
      %16 = sbr.rel target = $region3
    $region8: #{tpu_custom_call.1} parent=1 // loop_exit
      _
    %1581 = vsyncpa [#allocation3], 1
    %s1582 = scalar_lea.sflag [#allocation3], 1
    %1583 = vsyncpa %s1582, 1
    %1584 = vsyncpa [#allocation6], 1
    %1585 = vsyncpa [#allocation4], 1
    %s1586 = scalar_lea.sflag [#allocation4], 1
    %1587 = vsyncpa %s1586, 1

// kernel: tpu_custom_call.1
$region0: #{tpu_custom_call.1}
  #allocation0 [shape = 'u32[]', space=smem, size = 0x4, offset = 0x4, fixed_abs, tag = 'smem constant byte address 0x4 - core index']
  #allocation1 [shape = 'u32[144,128]{1,0:T(1,128)}', space=vmem, size = 0x12000, scoped, tag = 'internal scratch']
  %s0 = inlined_call_operand.hbm [shape: bf16[6,32,256], index: 0, kind: input, shape index: {}]
  %s1 = inlined_call_operand.vmem [shape: f32[32,2], index: 1, kind: input, shape index: {}]
  %s2 = inlined_call_operand.vmem [shape: f32[2,32], index: 2, kind: input, shape index: {}]
  %s3 = inlined_call_operand.hbm [shape: bf16[512,256], index: 3, kind: input, shape index: {}]
  %s4 = inlined_call_operand.hbm [shape: bf16[6,32,256], index: 4, kind: output, shape index: {}]
  %s5 = sld [smem:[#allocation0]]
  $region57: #{tpu_custom_call.1} parent=0
    _
  %s7 = ssub.s32 1, %s5
  %s8 = scalar_select 0, %s7, %s5
  $region1: #{tpu_custom_call.1} parent=0
    #allocation2 [shape = 'u8[98304]{0}', space=vmem, size = 0x18000, scoped, tag = 'input window, operand 0']
    #allocation3 [shape = 's32[2]{0}', space=sflag, size = 0x8, scoped, tag = 'scoped memory for tpu_custom_call.1']
    #allocation4 [shape = 's32[2]{0}', space=sflag, size = 0x8, scoped, tag = 'scoped memory for tpu_custom_call.1']
    #allocation5 [shape = 'u8[262144]{0}', space=vmem, size = 0x40000, scoped, tag = 'input window, operand 3, single buffered']
    #allocation6 [shape = 's32[1]{0}', space=sflag, size = 0x4, scoped, tag = 'scoped memory for tpu_custom_call.1']
    #allocation7 [shape = 'u8[98304]{0}', space=vmem, size = 0x18000, scoped, tag = 'output window, operand 0']
    %9 = vsyncpa [#allocation3], 0
    %s10 = scalar_lea.sflag [#allocation3], 1
    %11 = vsyncpa %s10, 0
    %12 = vsyncpa [#allocation6], 0
    %13 = vsyncpa [#allocation4], 0
    %s14 = scalar_lea.sflag [#allocation4], 1
    %15 = vsyncpa %s14, 0
    loop: start=0, step=1, limit=4
    $region2: #{tpu_custom_call.1} parent=1 // loop_pre_header
      _
    $region3: #{tpu_custom_call.1} parent=1 // loop_header
      %s17 = sphi 0, %s21
      %p18 = scmp.ge.s32.totalorder %s17, 4
      %s27 = sphi 0, %s29
      %s30 = sphi 0, %s27
      %s31 = sphi 0, %s30
      %s47 = sphi 0, %s31
      %s51 = sphi 0, %s51
      %s53 = sphi 0, %s51
      %s54 = sphi 0, %s53
      %s68 = sphi 0, %s54
      %s72 = sphi 0, %s72
      %s74 = sphi 0, %s72
      %s75 = sphi 0, %s74
      %s89 = sphi 0, %s75
      %s93 = sphi 0, %s93
      %s95 = sphi 0, %s93
      %s96 = sphi 0, %s95
      %s110 = sphi 0, %s96
      %s116 = sphi 0, %s118
      %s119 = sphi 0, %s116
      %s120 = sphi 0, %s119
      %s136 = sphi 0, %s120
    $region4: #{tpu_custom_call.1} parent=1 // loop_header_branch
      %20 = sbr.rel (%p18) target = $region8
    $region5: #{tpu_custom_call.1} parent=1 // loop_body
      %s22 = ssub.s32 %s17, 1
      %s23 = ssub.s32 %s17, 2
      %s24 = sadd.s32 %s17, 1
      %s25 = ssub.s32 %s17, %s24
      %p26 = scmp.eq.s32.totalorder %s25, 0
      %s28 = sadd.s32 %s27, 1
      %s29 = scalar_select %p26, %s27, %s28
      %p32 = pneg %p26
      %p33 = scmp.eq.s32.totalorder %s17, 1
      %p34 = por %p32, %p33
      %p35 = scmp.ne.s32.totalorder %s27, %s30
      %p36 = scmp.eq.s32.totalorder %s17, 0
      %p37 = por %p35, %p36
      %p38 = scmp.ne.s32.totalorder %s27, %s30
      %p39 = scmp.eq.s32.totalorder %s22, 1
      %p40 = por %p38, %p39
      %p41 = scmp.ne.s32.totalorder %s30, %s31
      %p42 = scmp.eq.s32.totalorder %s22, 0
      %p43 = por %p41, %p42
      %p44 = scmp.ne.s32.totalorder %s30, %s31
      %p45 = scmp.eq.s32.totalorder %s23, 1
      %p46 = por %p44, %p45
      %p48 = scmp.ne.s32.totalorder %s31, %s47
      %p49 = scmp.eq.s32.totalorder %s23, 0
      %p50 = por %p48, %p49
      %s52 = sadd.s32 %s51, 1
      %p55 = scmp.eq.s32.totalorder %s17, 1
      %p56 = scmp.ne.s32.totalorder %s51, %s53
      %p57 = scmp.eq.s32.totalorder %s17, 0
      %p58 = por %p56, %p57
      %p59 = scmp.ne.s32.totalorder %s51, %s53
      %p60 = scmp.eq.s32.totalorder %s22, 1
      %p61 = por %p59, %p60
      %p62 = scmp.ne.s32.totalorder %s53, %s54
      %p63 = scmp.eq.s32.totalorder %s22, 0
      %p64 = por %p62, %p63
      %p65 = scmp.ne.s32.totalorder %s53, %s54
      %p66 = scmp.eq.s32.totalorder %s23, 1
      %p67 = por %p65, %p66
      %p69 = scmp.ne.s32.totalorder %s54, %s68
      %p70 = scmp.eq.s32.totalorder %s23, 0
      %p71 = por %p69, %p70
      %s73 = sadd.s32 %s72, 1
      %p76 = scmp.eq.s32.totalorder %s17, 1
      %p77 = scmp.ne.s32.totalorder %s72, %s74
      %p78 = scmp.eq.s32.totalorder %s17, 0
      %p79 = por %p77, %p78
      %p80 = scmp.ne.s32.totalorder %s72, %s74
      %p81 = scmp.eq.s32.totalorder %s22, 1
      %p82 = por %p80, %p81
      %p83 = scmp.ne.s32.totalorder %s74, %s75
      %p84 = scmp.eq.s32.totalorder %s22, 0
      %p85 = por %p83, %p84
      %p86 = scmp.ne.s32.totalorder %s74, %s75
      %p87 = scmp.eq.s32.totalorder %s23, 1
      %p88 = por %p86, %p87
      %p90 = scmp.ne.s32.totalorder %s75, %s89
      %p91 = scmp.eq.s32.totalorder %s23, 0
      %p92 = por %p90, %p91
      %s94 = sadd.s32 %s93, 1
      %p97 = scmp.eq.s32.totalorder %s17, 1
      %p98 = scmp.ne.s32.totalorder %s93, %s95
      %p99 = scmp.eq.s32.totalorder %s17, 0
      %p100 = por %p98, %p99
      %p101 = scmp.ne.s32.totalorder %s93, %s95
      %p102 = scmp.eq.s32.totalorder %s22, 1
      %p103 = por %p101, %p102
      %p104 = scmp.ne.s32.totalorder %s95, %s96
      %p105 = scmp.eq.s32.totalorder %s22, 0
      %p106 = por %p104, %p105
      %p107 = scmp.ne.s32.totalorder %s95, %s96
      %p108 = scmp.eq.s32.totalorder %s23, 1
      %p109 = por %p107, %p108
      %p111 = scmp.ne.s32.totalorder %s96, %s110
      %p112 = scmp.eq.s32.totalorder %s23, 0
      %p113 = por %p111, %p112
      %s114 = ssub.s32 %s17, %s24
      %p115 = scmp.eq.s32.totalorder %s114, 0
      %s117 = sadd.s32 %s116, 1
      %s118 = scalar_select %p115, %s116, %s117
      %p121 = pneg %p115
      %p122 = scmp.eq.s32.totalorder %s17, 1
      %p123 = por %p121, %p122
      %p124 = scmp.ne.s32.totalorder %s116, %s119
      %p125 = scmp.eq.s32.totalorder %s17, 0
      %p126 = por %p124, %p125
      %p127 = scmp.ne.s32.totalorder %s116, %s119
      %p128 = scmp.eq.s32.totalorder %s22, 1
      %p129 = por %p127, %p128
      %p130 = scmp.ne.s32.totalorder %s119, %s120
      %p131 = scmp.eq.s32.totalorder %s22, 0
      %p132 = por %p130, %p131
      %p133 = scmp.ne.s32.totalorder %s119, %s120
      %p134 = scmp.eq.s32.totalorder %s23, 1
      %p135 = por %p133, %p134
      %p137 = scmp.ne.s32.totalorder %s120, %s136
      %p138 = scmp.eq.s32.totalorder %s23, 0
      %p139 = por %p137, %p138
      %p140 = scmp.le.s32.totalorder 1, %s17
      %p141 = scmp.lt.s32.totalorder %s17, 3
      %p142 = pnand %p140, %p141
      %p143 = pneg %p142
      // Predicated region
      $region9: #{tpu_custom_call.1} parent=5 // pred_check
        _
      $region10: #{tpu_custom_call.1} parent=5 // pred_check_branch
        %145 = sbr.rel (%p142) target = $region12
      $region11: #{tpu_custom_call.1} parent=5 // pred_region
        %s146 = ssub.s32 %s17, 1
        // Predicated region
        $region13: #{tpu_custom_call.1} parent=11 // pred_check
          %p147 = pneg %p64
        $region14: #{tpu_custom_call.1} parent=11 // pred_check_branch
          %149 = sbr.rel (%p147) target = $region16
        $region15: #{tpu_custom_call.1} parent=11 // pred_region
          _
        $region16: #{tpu_custom_call.1} parent=11 // pred_fallthru
          _
        // Predicated region
        $region17: #{tpu_custom_call.1} parent=11 // pred_check
          %p150 = pneg %p85
        $region18: #{tpu_custom_call.1} parent=11 // pred_check_branch
          %152 = sbr.rel (%p150) target = $region20
        $region19: #{tpu_custom_call.1} parent=11 // pred_region
          _
        $region20: #{tpu_custom_call.1} parent=11 // pred_fallthru
          _
        // Predicated region
        $region21: #{tpu_custom_call.1} parent=11 // pred_check
          %p153 = pneg %p106
        $region22: #{tpu_custom_call.1} parent=11 // pred_check_branch
          %155 = sbr.rel (%p153) target = $region24
        $region23: #{tpu_custom_call.1} parent=11 // pred_region
          %s157 = ssub.s32 8192, 8192
          %158 = vsyncadd [#allocation6], %s157
          %s159 = sshll.u32 [#allocation5], 4
          %s160 = int_to_ptr.vmem [resolvable:$true] %s159
          %165 = dma.hbm_to_vmem [thread:$0]  %s3, 8192, %s160, [#allocation6], 128, 128, 8
        $region24: #{tpu_custom_call.1} parent=11 // pred_fallthru
          _
      $region12: #{tpu_custom_call.1} parent=5 // pred_fallthru
        _
      %p166 = scmp.lt.s32.totalorder %s17, 2
      // Predicated region
      $region25: #{tpu_custom_call.1} parent=5 // pred_check
        %p167 = pneg %p166
      $region26: #{tpu_custom_call.1} parent=5 // pred_check_branch
        %169 = sbr.rel (%p167) target = $region28
      $region27: #{tpu_custom_call.1} parent=5 // pred_region
        // Predicated region
        $region29: #{tpu_custom_call.1} parent=27 // pred_check
          %p170 = pneg %p37
        $region30: #{tpu_custom_call.1} parent=27 // pred_check_branch
          %172 = sbr.rel (%p170) target = $region32
        $region31: #{tpu_custom_call.1} parent=27 // pred_region
          %s173 = sand.u32 %s27, 1
          %s174 = scalar_lea.sflag [#allocation3], %s173
          %s175 = sand.u32 %s27, 1
          %s176 = smul.addr %s175, 96
          %s177 = scalar_lea.vmem [#allocation2], %s176
          %s178 = smul.u32 3, %s17
          %s180 = ssub.s32 1536, 1536
          %181 = vsyncadd %s174, %s180
          %s182 = smul.addr %s178, 8
          %s183 = smul.addr %s182, 64
          %s184 = scalar_lea.hbm %s0, %s183
          %s185 = sshll.u32 %s177, 4
          %s186 = int_to_ptr.vmem [resolvable:$true] %s185
          %191 = dma.hbm_to_vmem [thread:$0]  %s184, 1536, %s186, %s174, 128, 128, 8
        $region32: #{tpu_custom_call.1} parent=27 // pred_fallthru
          _
      $region28: #{tpu_custom_call.1} parent=5 // pred_fallthru
        _
      %p192 = scmp.le.s32.totalorder 1, %s17
      %p193 = scmp.lt.s32.totalorder %s17, 3
      %p194 = pnand %p192, %p193
      %p195 = pneg %p194
      // Predicated region
      $region33: #{tpu_custom_call.1} parent=5 // pred_check
        _
      $region34: #{tpu_custom_call.1} parent=5 // pred_check_branch
        %197 = sbr.rel (%p194) target = $region36
      $region35: #{tpu_custom_call.1} parent=5 // pred_region
        %s198 = ssub.s32 %s17, 1
        %s199 = sand.u32 %s30, 1
        %s200 = scalar_lea.sflag [#allocation3], %s199
        %s201 = sand.u32 %s30, 1
        %s202 = smul.addr %s201, 96
        %s203 = scalar_lea.vmem [#allocation2], %s202
        // Predicated region
        $region37: #{tpu_custom_call.1} parent=35 // pred_check
          %p204 = pneg %p43
        $region38: #{tpu_custom_call.1} parent=35 // pred_check_branch
          %206 = sbr.rel (%p204) target = $region40
        $region39: #{tpu_custom_call.1} parent=35 // pred_region
          %207 = dma.done %s200, 1536
        $region40: #{tpu_custom_call.1} parent=35 // pred_fallthru
          _
        // Predicated region
        $region41: #{tpu_custom_call.1} parent=35 // pred_check
          %p208 = pneg %p106
        $region42: #{tpu_custom_call.1} parent=35 // pred_check_branch
          %210 = sbr.rel (%p208) target = $region44
        $region43: #{tpu_custom_call.1} parent=35 // pred_region
          %211 = dma.done [#allocation6], 8192
        $region44: #{tpu_custom_call.1} parent=35 // pred_fallthru
          _
        %s212 = sand.u32 %s30, 1
        %s213 = scalar_lea.sflag [#allocation3], %s212
        %s214 = sand.u32 %s30, 1
        %s215 = smul.addr %s214, 96
        %s216 = scalar_lea.vmem [#allocation2], %s215
        %p217 = pneg %p43
        %p218 = pneg %p40
        %p219 = pneg %p64
        %p220 = pneg %p61
        %p221 = pneg %p85
        %p222 = pneg %p82
        %p223 = pneg %p106
        %p224 = pneg %p103
        %p225 = pneg %p132
        %p226 = pneg %p129
        %s227 = sand.u32 %s119, 1
        %s228 = scalar_lea.sflag [#allocation4], %s227
        %s229 = sand.u32 %s119, 1
        %s230 = smul.addr %s229, 96
        %s231 = scalar_lea.vmem [#allocation7], %s230
        %s232 = smul.u32 3, %s22
        %s233 = smul.u32 3, %s22
        %v234 = vld [vmem:[%s203] sm:$0xff]
        %v235 = vld [vmem:[%s203 + $0x8] sm:$0xff]
        %v236 = vld [vmem:[%s203 + $0x10] sm:$0xff]
        %v237 = vld [vmem:[%s203 + $0x18] sm:$0xff]
        %v238 = vld [vmem:[%s203 + $0x20] sm:$0xff]
        %v239 = vld [vmem:[%s203 + $0x28] sm:$0xff]
        %v240 = vld [vmem:[%s203 + $0x30] sm:$0xff]
        %v241 = vld [vmem:[%s203 + $0x38] sm:$0xff]
        %v242 = vld [vmem:[%s203 + $0x40] sm:$0xff]
        %v243 = vld [vmem:[%s203 + $0x48] sm:$0xff]
        %v244 = vld [vmem:[%s203 + $0x50] sm:$0xff]
        %v245 = vld [vmem:[%s203 + $0x58] sm:$0xff]
        %v246 = vunpack.c.l.bf16 %v234
        %v247 = vunpack.c.h.bf16 %v234
        %v248 = vunpack.c.l.bf16 %v235
        %v249 = vunpack.c.h.bf16 %v235
        %v250 = vunpack.c.l.bf16 %v236
        %v251 = vunpack.c.h.bf16 %v236
        %v252 = vunpack.c.l.bf16 %v237
        %v253 = vunpack.c.h.bf16 %v237
        %v254 = vunpack.c.l.bf16 %v238
        %v255 = vunpack.c.h.bf16 %v238
        %v256 = vunpack.c.l.bf16 %v239
        %v257 = vunpack.c.h.bf16 %v239
        %v258 = vunpack.c.l.bf16 %v240
        %v259 = vunpack.c.h.bf16 %v240
        %v260 = vunpack.c.l.bf16 %v241
        %v261 = vunpack.c.h.bf16 %v241
        %v262 = vunpack.c.l.bf16 %v242
        %v263 = vunpack.c.h.bf16 %v242
        %v264 = vunpack.c.l.bf16 %v243
        %v265 = vunpack.c.h.bf16 %v243
        %v266 = vunpack.c.l.bf16 %v244
        %v267 = vunpack.c.h.bf16 %v244
        %v268 = vunpack.c.l.bf16 %v245
        %v269 = vunpack.c.h.bf16 %v245
        %v270 = vmax.f32 %v246, %v247
        %271 = vmax.xlane.f32.xlu0 %v270
        %v272 = vpop.xlane.xlu0 %271
        %v273 = vmax.f32 %v248, %v249
        %274 = vmax.xlane.f32.xlu0 %v273
        %v275 = vpop.xlane.xlu0 %274
        %v276 = vmax.f32 %v250, %v251
        %277 = vmax.xlane.f32.xlu0 %v276
        %v278 = vpop.xlane.xlu0 %277
        %v279 = vmax.f32 %v252, %v253
        %280 = vmax.xlane.f32.xlu0 %v279
        %v281 = vpop.xlane.xlu0 %280
        %v282 = vmax.f32 %v254, %v255
        %283 = vmax.xlane.f32.xlu0 %v282
        %v284 = vpop.xlane.xlu0 %283
        %v285 = vmax.f32 %v256, %v257
        %286 = vmax.xlane.f32.xlu0 %v285
        %v287 = vpop.xlane.xlu0 %286
        %v288 = vmax.f32 %v258, %v259
        %289 = vmax.xlane.f32.xlu0 %v288
        %v290 = vpop.xlane.xlu0 %289
        %v291 = vmax.f32 %v260, %v261
        %292 = vmax.xlane.f32.xlu0 %v291
        %v293 = vpop.xlane.xlu0 %292
        %v294 = vmax.f32 %v262, %v263
        %295 = vmax.xlane.f32.xlu0 %v294
        %v296 = vpop.xlane.xlu0 %295
        %v297 = vmax.f32 %v264, %v265
        %298 = vmax.xlane.f32.xlu0 %v297
        %v299 = vpop.xlane.xlu0 %298
        %v300 = vmax.f32 %v266, %v267
        %301 = vmax.xlane.f32.xlu0 %v300
        %v302 = vpop.xlane.xlu0 %301
        %v303 = vmax.f32 %v268, %v269
        %304 = vmax.xlane.f32.xlu0 %v303
        %v305 = vpop.xlane.xlu0 %304
        %v306 = vadd.f32 %v246, %v247
        %307 = vadd.xlane.f32.xlu0 %v306
        %v308 = vpop.xlane.xlu0 %307
        %v309 = vadd.f32 %v248, %v249
        %310 = vadd.xlane.f32.xlu0 %v309
        %v311 = vpop.xlane.xlu0 %310
        %v312 = vadd.f32 %v250, %v251
        %313 = vadd.xlane.f32.xlu0 %v312
        %v314 = vpop.xlane.xlu0 %313
        %v315 = vadd.f32 %v252, %v253
        %316 = vadd.xlane.f32.xlu0 %v315
        %v317 = vpop.xlane.xlu0 %316
        %v318 = vadd.f32 %v254, %v255
        %319 = vadd.xlane.f32.xlu0 %v318
        %v320 = vpop.xlane.xlu0 %319
        %v321 = vadd.f32 %v256, %v257
        %322 = vadd.xlane.f32.xlu0 %v321
        %v323 = vpop.xlane.xlu0 %322
        %v324 = vadd.f32 %v258, %v259
        %325 = vadd.xlane.f32.xlu0 %v324
        %v326 = vpop.xlane.xlu0 %325
        %v327 = vadd.f32 %v260, %v261
        %328 = vadd.xlane.f32.xlu0 %v327
        %v329 = vpop.xlane.xlu0 %328
        %v330 = vadd.f32 %v262, %v263
        %331 = vadd.xlane.f32.xlu0 %v330
        %v332 = vpop.xlane.xlu0 %331
        %v333 = vadd.f32 %v264, %v265
        %334 = vadd.xlane.f32.xlu0 %v333
        %v335 = vpop.xlane.xlu0 %334
        %v336 = vadd.f32 %v266, %v267
        %337 = vadd.xlane.f32.xlu0 %v336
        %v338 = vpop.xlane.xlu0 %337
        %v339 = vadd.f32 %v268, %v269
        %340 = vadd.xlane.f32.xlu0 %v339
        %v341 = vpop.xlane.xlu0 %340
        %v342 = vmul.f32 %v308, 0.00390625
        %v343 = vmul.f32 %v311, 0.00390625
        %v344 = vmul.f32 %v314, 0.00390625
        %v345 = vmul.f32 %v317, 0.00390625
        %v346 = vmul.f32 %v320, 0.00390625
        %v347 = vmul.f32 %v323, 0.00390625
        %v348 = vmul.f32 %v326, 0.00390625
        %v349 = vmul.f32 %v329, 0.00390625
        %v350 = vmul.f32 %v332, 0.00390625
        %v351 = vmul.f32 %v335, 0.00390625
        %v352 = vmul.f32 %v338, 0.00390625
        %v353 = vmul.f32 %v341, 0.00390625
        %v366 = vlaneseq
        %v367 = vand.u32 %v366, 127
        %v368 = vlaneseq
        %v369 = vshrl.u32 %v368, 7
        %v370 = vsub.s32 %v367, %v369
        %v371 = vrot.slane %v272, %v370
        %v372 = vadd.s32 %v367, 4294967288
        %v373 = vlaneseq
        %v374 = vshrl.u32 %v373, 7
        %v375 = vsub.s32 %v372, %v374
        %v376 = vrot.slane %v275, %v375
        %vm377 = vcmask 130112
        %v378 = vsel %vm377, %v376, %v371
        %v379 = vadd.s32 %v367, 4294967280
        %v380 = vlaneseq
        %v381 = vshrl.u32 %v380, 7
        %v382 = vsub.s32 %v379, %v381
        %v383 = vrot.slane %v278, %v382
        %vm384 = vcmask 195712
        %v385 = vsel %vm384, %v383, %v378
        %v386 = vadd.s32 %v367, 4294967272
        %v387 = vlaneseq
        %v388 = vshrl.u32 %v387, 7
        %v389 = vsub.s32 %v386, %v388
        %v390 = vrot.slane %v281, %v389
        %vm391 = vcmask 261312
        %v392 = vsel %vm391, %v390, %v385
        %v393 = vlaneseq
        %v394 = vshrl.u32 %v393, 7
        %v395 = vsub.s32 %v367, %v394
        %v396 = vrot.slane %v284, %v395
        %v397 = vlaneseq
        %v398 = vshrl.u32 %v397, 7
        %v399 = vsub.s32 %v372, %v398
        %v400 = vrot.slane %v287, %v399
        %v401 = vsel %vm377, %v400, %v396
        %v402 = vlaneseq
        %v403 = vshrl.u32 %v402, 7
        %v404 = vsub.s32 %v379, %v403
        %v405 = vrot.slane %v290, %v404
        %v406 = vsel %vm384, %v405, %v401
        %v407 = vlaneseq
        %v408 = vshrl.u32 %v407, 7
        %v409 = vsub.s32 %v386, %v408
        %v410 = vrot.slane %v293, %v409
        %v411 = vsel %vm391, %v410, %v406
        %v412 = vlaneseq
        %v413 = vshrl.u32 %v412, 7
        %v414 = vsub.s32 %v367, %v413
        %v415 = vrot.slane %v296, %v414
        %v416 = vlaneseq
        %v417 = vshrl.u32 %v416, 7
        %v418 = vsub.s32 %v372, %v417
        %v419 = vrot.slane %v299, %v418
        %v420 = vsel %vm377, %v419, %v415
        %v421 = vlaneseq
        %v422 = vshrl.u32 %v421, 7
        %v423 = vsub.s32 %v379, %v422
        %v424 = vrot.slane %v302, %v423
        %v425 = vsel %vm384, %v424, %v420
        %v426 = vlaneseq
        %v427 = vshrl.u32 %v426, 7
        %v428 = vsub.s32 %v386, %v427
        %v429 = vrot.slane %v305, %v428
        %v430 = vsel %vm391, %v429, %v425
        %vm431 = vcmask 1041409
        %v432 = vsel %vm431, %v411, %v392
        %vm433 = vcmask 1042434
        %v434 = vsel %vm433, %v430, %v432
        %v448 = vlaneseq
        %v449 = vshrl.u32 %v448, 7
        %v450 = vsub.s32 %v367, %v449
        %v451 = vrot.slane %v342, %v450
        %v452 = vlaneseq
        %v453 = vshrl.u32 %v452, 7
        %v454 = vsub.s32 %v372, %v453
        %v455 = vrot.slane %v343, %v454
        %v456 = vsel %vm377, %v455, %v451
        %v457 = vlaneseq
        %v458 = vshrl.u32 %v457, 7
        %v459 = vsub.s32 %v379, %v458
        %v460 = vrot.slane %v344, %v459
        %v461 = vsel %vm384, %v460, %v456
        %v462 = vlaneseq
        %v463 = vshrl.u32 %v462, 7
        %v464 = vsub.s32 %v386, %v463
        %v465 = vrot.slane %v345, %v464
        %v466 = vsel %vm391, %v465, %v461
        %v467 = vlaneseq
        %v468 = vshrl.u32 %v467, 7
        %v469 = vsub.s32 %v367, %v468
        %v470 = vrot.slane %v346, %v469
        %v471 = vlaneseq
        %v472 = vshrl.u32 %v471, 7
        %v473 = vsub.s32 %v372, %v472
        %v474 = vrot.slane %v347, %v473
        %v475 = vsel %vm377, %v474, %v470
        %v476 = vlaneseq
        %v477 = vshrl.u32 %v476, 7
        %v478 = vsub.s32 %v379, %v477
        %v479 = vrot.slane %v348, %v478
        %v480 = vsel %vm384, %v479, %v475
        %v481 = vlaneseq
        %v482 = vshrl.u32 %v481, 7
        %v483 = vsub.s32 %v386, %v482
        %v484 = vrot.slane %v349, %v483
        %v485 = vsel %vm391, %v484, %v480
        %v486 = vlaneseq
        %v487 = vshrl.u32 %v486, 7
        %v488 = vsub.s32 %v367, %v487
        %v489 = vrot.slane %v350, %v488
        %v490 = vlaneseq
        %v491 = vshrl.u32 %v490, 7
        %v492 = vsub.s32 %v372, %v491
        %v493 = vrot.slane %v351, %v492
        %v494 = vsel %vm377, %v493, %v489
        %v495 = vlaneseq
        %v496 = vshrl.u32 %v495, 7
        %v497 = vsub.s32 %v379, %v496
        %v498 = vrot.slane %v352, %v497
        %v499 = vsel %vm384, %v498, %v494
        %v500 = vlaneseq
        %v501 = vshrl.u32 %v500, 7
        %v502 = vsub.s32 %v386, %v501
        %v503 = vrot.slane %v353, %v502
        %v504 = vsel %vm391, %v503, %v499
        %vm505 = vcmask 1044484
        %v506 = vsel %vm505, %v485, %v466
        %vm507 = vcmask 1045509
        %v508 = vsel %vm507, %v504, %v506
        %vm510 = vcmask 1042432
        %v511 = vsel %vm510, %v434, %v508
        %v512 = vld [vmem:[%s1] sm:$0xff]
        %v513 = vld [vmem:[%s1 + $0x8] sm:$0xff]
        %v514 = vld [vmem:[%s1 + $0x10] sm:$0xff]
        %v515 = vld [vmem:[%s1 + $0x18] sm:$0xff]
        %v516 = vld [vmem:[%s2] sm:$0x3]
        %vm517 = vcmask 261120
        %v519 = vsel %vm517, %v511, 0
        %521 = vmatprep.subr.mxu0 0.0
        %522 = vmatpush1.msra.mxu0 %v512
        %523 = vmatprep.subr.mxu0 0.0
        %524 = vmatpush1.msra.mxu0 %v513
        %525 = vmatprep.subr.mxu0 0.0
        %526 = vmatpush1.msra.mxu0 %v514
        %527 = vmatprep.subr.mxu0 0.0
        %528 = vmatpush1.msra.mxu0 %v515
        %529 = vmatprep.subr.mxu0 0.0
        %530 = vmatpush1.msra.mxu0 0.0
        %531 = vmatprep.subr.mxu0 0.0
        %532 = vmatpush1.msra.mxu0 0.0
        %533 = vmatprep.subr.mxu0 0.0
        %534 = vmatpush1.msra.mxu0 0.0
        %535 = vmatprep.subr.mxu0 0.0
        %536 = vmatpush1.msra.mxu0 0.0
        %537 = vmatprep.subr.mxu0 0.0
        %538 = vmatpush1.msra.mxu0 0.0
        %539 = vmatprep.subr.mxu0 0.0
        %540 = vmatpush1.msra.mxu0 0.0
        %541 = vmatprep.subr.mxu0 0.0
        %542 = vmatpush1.msra.mxu0 0.0
        %543 = vmatprep.subr.mxu0 0.0
        %544 = vmatpush1.msra.mxu0 0.0
        %545 = vmatprep.subr.mxu0 0.0
        %546 = vmatpush1.msra.mxu0 0.0
        %547 = vmatprep.subr.mxu0 0.0
        %548 = vmatpush1.msra.mxu0 0.0
        %549 = vmatprep.subr.mxu0 0.0
        %550 = vmatpush1.msra.mxu0 0.0
        %551 = vmatprep.subr.mxu0 0.0
        %552 = vmatpush1.msra.mxu0 0.0
        %553 = vmatprep.subr.mxu0 0.0
        %554 = vmatpush1.msra.mxu0 0.0
        %555 = vmatprep.subr.mxu0 0.0
        %556 = vmatpush1.msra.mxu0 0.0
        %557 = vmatprep.subr.mxu0 0.0
        %558 = vmatpush1.msra.mxu0 0.0
        %559 = vmatprep.subr.mxu0 0.0
        %560 = vmatpush1.msra.mxu0 0.0
        %561 = vmatprep.subr.mxu0 0.0
        %562 = vmatpush1.msra.mxu0 0.0
        %563 = vmatprep.subr.mxu0 0.0
        %564 = vmatpush1.msra.mxu0 0.0
        %565 = vmatprep.subr.mxu0 0.0
        %566 = vmatpush1.msra.mxu0 0.0
        %567 = vmatprep.subr.mxu0 0.0
        %568 = vmatpush1.msra.mxu0 0.0
        %569 = vmatprep.subr.mxu0 0.0
        %570 = vmatpush1.msra.mxu0 0.0
        %571 = vmatprep.subr.mxu0 0.0
        %572 = vmatpush1.msra.mxu0 0.0
        %573 = vmatprep.subr.mxu0 0.0
        %574 = vmatpush1.msra.mxu0 0.0
        %575 = vmatprep.subr.mxu0 0.0
        %576 = vmatpush1.msra.mxu0 0.0
        %577 = vmatprep.subr.mxu0 0.0
        %578 = vmatpush1.msra.mxu0 0.0
        %579 = vmatprep.subr.mxu0 0.0
        %580 = vmatpush1.msra.mxu0 0.0
        %581 = vmatprep.subr.mxu0 0.0
        %582 = vmatpush1.msra.mxu0 0.0
        %583 = vmatprep.subr.mxu0 0.0
        %584 = vmatpush1.msra.mxu0 0.0
        %585 = vmatprep.mubr.f32.mxu0 0.0
        %586 = vmatmul.mubr.f32.gmra.mrb[0].mxu0 %v519
        %v587 = vpop.f32.mrb[0].mxu0
        %v588 = vadd.f32 0.0, %v587
        %v589 = vpop.f32.mrb[0].mxu0
        %590 = vdwg.mxu0
        %v591 = vmax.f32 %v588, 0.0
        %vm592 = vcmask 15360
        %v594 = vsel %vm592, %v591, 0
        %vm596 = vcmask 1041408
        %v598 = vsel %vm596, %v516, 0
        %600 = vmatprep.subr.mxu0 0.0
        %601 = vmatpush1.msra.mxu0 %v598
        %602 = vmatprep.subr.mxu0 0.0
        %603 = vmatpush1.msra.mxu0 0.0
        %604 = vmatprep.subr.mxu0 0.0
        %605 = vmatpush1.msra.mxu0 0.0
        %606 = vmatprep.subr.mxu0 0.0
        %607 = vmatpush1.msra.mxu0 0.0
        %608 = vmatprep.subr.mxu0 0.0
        %609 = vmatpush1.msra.mxu0 0.0
        %610 = vmatprep.subr.mxu0 0.0
        %611 = vmatpush1.msra.mxu0 0.0
        %612 = vmatprep.subr.mxu0 0.0
        %613 = vmatpush1.msra.mxu0 0.0
        %614 = vmatprep.subr.mxu0 0.0
        %615 = vmatpush1.msra.mxu0 0.0
        %616 = vmatprep.subr.mxu0 0.0
        %617 = vmatpush1.msra.mxu0 0.0
        %618 = vmatprep.subr.mxu0 0.0
        %619 = vmatpush1.msra.mxu0 0.0
        %620 = vmatprep.subr.mxu0 0.0
        %621 = vmatpush1.msra.mxu0 0.0
        %622 = vmatprep.subr.mxu0 0.0
        %623 = vmatpush1.msra.mxu0 0.0
        %624 = vmatprep.subr.mxu0 0.0
        %625 = vmatpush1.msra.mxu0 0.0
        %626 = vmatprep.subr.mxu0 0.0
        %627 = vmatpush1.msra.mxu0 0.0
        %628 = vmatprep.subr.mxu0 0.0
        %629 = vmatpush1.msra.mxu0 0.0
        %630 = vmatprep.subr.mxu0 0.0
        %631 = vmatpush1.msra.mxu0 0.0
        %632 = vmatprep.subr.mxu0 0.0
        %633 = vmatpush1.msra.mxu0 0.0
        %634 = vmatprep.subr.mxu0 0.0
        %635 = vmatpush1.msra.mxu0 0.0
        %636 = vmatprep.subr.mxu0 0.0
        %637 = vmatpush1.msra.mxu0 0.0
        %638 = vmatprep.subr.mxu0 0.0
        %639 = vmatpush1.msra.mxu0 0.0
        %640 = vmatprep.subr.mxu0 0.0
        %641 = vmatpush1.msra.mxu0 0.0
        %642 = vmatprep.subr.mxu0 0.0
        %643 = vmatpush1.msra.mxu0 0.0
        %644 = vmatprep.subr.mxu0 0.0
        %645 = vmatpush1.msra.mxu0 0.0
        %646 = vmatprep.subr.mxu0 0.0
        %647 = vmatpush1.msra.mxu0 0.0
        %648 = vmatprep.subr.mxu0 0.0
        %649 = vmatpush1.msra.mxu0 0.0
        %650 = vmatprep.subr.mxu0 0.0
        %651 = vmatpush1.msra.mxu0 0.0
        %652 = vmatprep.subr.mxu0 0.0
        %653 = vmatpush1.msra.mxu0 0.0
        %654 = vmatprep.subr.mxu0 0.0
        %655 = vmatpush1.msra.mxu0 0.0
        %656 = vmatprep.subr.mxu0 0.0
        %657 = vmatpush1.msra.mxu0 0.0
        %658 = vmatprep.subr.mxu0 0.0
        %659 = vmatpush1.msra.mxu0 0.0
        %660 = vmatprep.subr.mxu0 0.0
        %661 = vmatpush1.msra.mxu0 0.0
        %662 = vmatprep.subr.mxu0 0.0
        %663 = vmatpush1.msra.mxu0 0.0
        %664 = vmatprep.mubr.f32.mxu0 0.0
        %665 = vmatmul.mubr.f32.gmra.mrb[0].mxu0 %v594
        %v666 = vpop.f32.mrb[0].mxu0
        %v667 = vadd.f32 0.0, %v666
        %v668 = vpop.f32.mrb[0].mxu0
        %669 = vdwg.mxu0
        %v671 = vrot.slane %v667, 3
        %v673 = vadd.f32 %v667, %v671
        %v674 = vxor.u32 %v673, 2147483648
        %v675 = vmul.f32 %v674, 1.442695
        %v676 = vpow.pop %v675
        %v677 = vadd.f32 %v676, 1.0
        %v678 = vrcp.pop %v677
        %v679 = vmul.f32 1.0, %v678
        %v680 = vlaneseq
        %v681 = vshrl.u32 %v680, 7
        %v682 = vsub.s32 0, %v681
        %v683 = vrot.slane %v679, %v682
        %685 = vbcast.lane.b32.xlu0 %v683, 256
        %v686 = vpop.permute.xlu0 %685
        %s688 = sor.u32 256, 8
        %689 = vbcast.lane.b32.xlu0 %v683, %s688
        %v690 = vpop.permute.xlu0 %689
        %s692 = sor.u32 256, 16
        %693 = vbcast.lane.b32.xlu0 %v683, %s692
        %v694 = vpop.permute.xlu0 %693
        %s696 = sor.u32 256, 24
        %697 = vbcast.lane.b32.xlu0 %v683, %s696
        %v698 = vpop.permute.xlu0 %697
        %v699 = vlaneseq
        %v700 = vshrl.u32 %v699, 7
        %v701 = vsub.s32 1, %v700
        %v702 = vrot.slane %v679, %v701
        %704 = vbcast.lane.b32.xlu0 %v702, 256
        %v705 = vpop.permute.xlu0 %704
        %s707 = sor.u32 256, 8
        %708 = vbcast.lane.b32.xlu0 %v702, %s707
        %v709 = vpop.permute.xlu0 %708
        %s711 = sor.u32 256, 16
        %712 = vbcast.lane.b32.xlu0 %v702, %s711
        %v713 = vpop.permute.xlu0 %712
        %s715 = sor.u32 256, 24
        %716 = vbcast.lane.b32.xlu0 %v702, %s715
        %v717 = vpop.permute.xlu0 %716
        %v718 = vlaneseq
        %v719 = vshrl.u32 %v718, 7
        %v720 = vsub.s32 2, %v719
        %v721 = vrot.slane %v679, %v720
        %723 = vbcast.lane.b32.xlu0 %v721, 256
        %v724 = vpop.permute.xlu0 %723
        %s726 = sor.u32 256, 8
        %727 = vbcast.lane.b32.xlu0 %v721, %s726
        %v728 = vpop.permute.xlu0 %727
        %s730 = sor.u32 256, 16
        %731 = vbcast.lane.b32.xlu0 %v721, %s730
        %v732 = vpop.permute.xlu0 %731
        %s734 = sor.u32 256, 24
        %735 = vbcast.lane.b32.xlu0 %v721, %s734
        %v736 = vpop.permute.xlu0 %735
        %v737 = vmul.f32 %v246, %v686
        %v738 = vmul.f32 %v247, %v686
        %v739 = vmul.f32 %v248, %v690
        %v740 = vmul.f32 %v249, %v690
        %v741 = vmul.f32 %v250, %v694
        %v742 = vmul.f32 %v251, %v694
        %v743 = vmul.f32 %v252, %v698
        %v744 = vmul.f32 %v253, %v698
        %v745 = vmul.f32 %v254, %v705
        %v746 = vmul.f32 %v255, %v705
        %v747 = vmul.f32 %v256, %v709
        %v748 = vmul.f32 %v257, %v709
        %v749 = vmul.f32 %v258, %v713
        %v750 = vmul.f32 %v259, %v713
        %v751 = vmul.f32 %v260, %v717
        %v752 = vmul.f32 %v261, %v717
        %v753 = vmul.f32 %v262, %v724
        %v754 = vmul.f32 %v263, %v724
        %v755 = vmul.f32 %v264, %v728
        %v756 = vmul.f32 %v265, %v728
        %v757 = vmul.f32 %v266, %v732
        %v758 = vmul.f32 %v267, %v732
        %v759 = vmul.f32 %v268, %v736
        %v760 = vmul.f32 %v269, %v736
        %v761 = vadd.f32 %v737, %v739
        %v762 = vadd.f32 %v761, %v741
        %v763 = vadd.f32 %v762, %v743
        %v764 = vrot.slane %v763, 4
        %v765 = vadd.f32 %v763, %v764
        %v766 = vrot.slane %v765, 2
        %v767 = vadd.f32 %v765, %v766
        %v768 = vrot.slane %v767, 1
        %v769 = vadd.f32 %v767, %v768
        %v770 = vadd.f32 %v738, %v740
        %v771 = vadd.f32 %v770, %v742
        %v772 = vadd.f32 %v771, %v744
        %v773 = vrot.slane %v772, 4
        %v774 = vadd.f32 %v772, %v773
        %v775 = vrot.slane %v774, 2
        %v776 = vadd.f32 %v774, %v775
        %v777 = vrot.slane %v776, 1
        %v778 = vadd.f32 %v776, %v777
        %v779 = vadd.f32 %v745, %v747
        %v780 = vadd.f32 %v779, %v749
        %v781 = vadd.f32 %v780, %v751
        %v782 = vrot.slane %v781, 4
        %v783 = vadd.f32 %v781, %v782
        %v784 = vrot.slane %v783, 2
        %v785 = vadd.f32 %v783, %v784
        %v786 = vrot.slane %v785, 1
        %v787 = vadd.f32 %v785, %v786
        %v788 = vadd.f32 %v746, %v748
        %v789 = vadd.f32 %v788, %v750
        %v790 = vadd.f32 %v789, %v752
        %v791 = vrot.slane %v790, 4
        %v792 = vadd.f32 %v790, %v791
        %v793 = vrot.slane %v792, 2
        %v794 = vadd.f32 %v792, %v793
        %v795 = vrot.slane %v794, 1
        %v796 = vadd.f32 %v794, %v795
        %v797 = vadd.f32 %v753, %v755
        %v798 = vadd.f32 %v797, %v757
        %v799 = vadd.f32 %v798, %v759
        %v800 = vrot.slane %v799, 4
        %v801 = vadd.f32 %v799, %v800
        %v802 = vrot.slane %v801, 2
        %v803 = vadd.f32 %v801, %v802
        %v804 = vrot.slane %v803, 1
        %v805 = vadd.f32 %v803, %v804
        %v806 = vadd.f32 %v754, %v756
        %v807 = vadd.f32 %v806, %v758
        %v808 = vadd.f32 %v807, %v760
        %v809 = vrot.slane %v808, 4
        %v810 = vadd.f32 %v808, %v809
        %v811 = vrot.slane %v810, 2
        %v812 = vadd.f32 %v810, %v811
        %v813 = vrot.slane %v812, 1
        %v814 = vadd.f32 %v812, %v813
        %v815 = vmul.f32 %v769, 0.03125
        %v816 = vmul.f32 %v778, 0.03125
        %v817 = vmul.f32 %v787, 0.03125
        %v818 = vmul.f32 %v796, 0.03125
        %v819 = vmul.f32 %v805, 0.03125
        %v820 = vmul.f32 %v814, 0.03125
        %v821 = vmax.f32 %v737, %v739
        %v822 = vmax.f32 %v821, %v741
        %v823 = vmax.f32 %v822, %v743
        %v824 = vrot.slane %v823, 4
        %v825 = vmax.f32 %v823, %v824
        %v826 = vrot.slane %v825, 2
        %v827 = vmax.f32 %v825, %v826
        %v828 = vrot.slane %v827, 1
        %v829 = vmax.f32 %v827, %v828
        %v830 = vmax.f32 %v738, %v740
        %v831 = vmax.f32 %v830, %v742
        %v832 = vmax.f32 %v831, %v744
        %v833 = vrot.slane %v832, 4
        %v834 = vmax.f32 %v832, %v833
        %v835 = vrot.slane %v834, 2
        %v836 = vmax.f32 %v834, %v835
        %v837 = vrot.slane %v836, 1
        %v838 = vmax.f32 %v836, %v837
        %v839 = vmax.f32 %v745, %v747
        %v840 = vmax.f32 %v839, %v749
        %v841 = vmax.f32 %v840, %v751
        %v842 = vrot.slane %v841, 4
        %v843 = vmax.f32 %v841, %v842
        %v844 = vrot.slane %v843, 2
        %v845 = vmax.f32 %v843, %v844
        %v846 = vrot.slane %v845, 1
        %v847 = vmax.f32 %v845, %v846
        %v848 = vmax.f32 %v746, %v748
        %v849 = vmax.f32 %v848, %v750
        %v850 = vmax.f32 %v849, %v752
        %v851 = vrot.slane %v850, 4
        %v852 = vmax.f32 %v850, %v851
        %v853 = vrot.slane %v852, 2
        %v854 = vmax.f32 %v852, %v853
        %v855 = vrot.slane %v854, 1
        %v856 = vmax.f32 %v854, %v855
        %v857 = vmax.f32 %v753, %v755
        %v858 = vmax.f32 %v857, %v757
        %v859 = vmax.f32 %v858, %v759
        %v860 = vrot.slane %v859, 4
        %v861 = vmax.f32 %v859, %v860
        %v862 = vrot.slane %v861, 2
        %v863 = vmax.f32 %v861, %v862
        %v864 = vrot.slane %v863, 1
        %v865 = vmax.f32 %v863, %v864
        %v866 = vmax.f32 %v754, %v756
        %v867 = vmax.f32 %v866, %v758
        %v868 = vmax.f32 %v867, %v760
        %v869 = vrot.slane %v868, 4
        %v870 = vmax.f32 %v868, %v869
        %v871 = vrot.slane %v870, 2
        %v872 = vmax.f32 %v870, %v871
        %v873 = vrot.slane %v872, 1
        %v874 = vmax.f32 %v872, %v873
        %v875 = vld [vmem:[#allocation5] sm:$0xff]
        %v876 = vld [vmem:[#allocation5 + $0x8] sm:$0xff]
        %v877 = vld [vmem:[#allocation5 + $0x10] sm:$0xff]
        %v878 = vld [vmem:[#allocation5 + $0x18] sm:$0xff]
        %v879 = vld [vmem:[#allocation5 + $0x20] sm:$0xff]
        %v880 = vld [vmem:[#allocation5 + $0x28] sm:$0xff]
        %v881 = vld [vmem:[#allocation5 + $0x30] sm:$0xff]
        %v882 = vld [vmem:[#allocation5 + $0x38] sm:$0xff]
        %v883 = vld [vmem:[#allocation5 + $0x40] sm:$0xff]
        %v884 = vld [vmem:[#allocation5 + $0x48] sm:$0xff]
        %v885 = vld [vmem:[#allocation5 + $0x50] sm:$0xff]
        %v886 = vld [vmem:[#allocation5 + $0x58] sm:$0xff]
        %v887 = vld [vmem:[#allocation5 + $0x60] sm:$0xff]
        %v888 = vld [vmem:[#allocation5 + $0x68] sm:$0xff]
        %v889 = vld [vmem:[#allocation5 + $0x70] sm:$0xff]
        %v890 = vld [vmem:[#allocation5 + $0x78] sm:$0xff]
        %v891 = vld [vmem:[#allocation5 + $0x80] sm:$0xff]
        %v892 = vld [vmem:[#allocation5 + $0x88] sm:$0xff]
        %v893 = vld [vmem:[#allocation5 + $0x90] sm:$0xff]
        %v894 = vld [vmem:[#allocation5 + $0x98] sm:$0xff]
        %v895 = vld [vmem:[#allocation5 + $0xa0] sm:$0xff]
        %v896 = vld [vmem:[#allocation5 + $0xa8] sm:$0xff]
        %v897 = vld [vmem:[#allocation5 + $0xb0] sm:$0xff]
        %v898 = vld [vmem:[#allocation5 + $0xb8] sm:$0xff]
        %v899 = vld [vmem:[#allocation5 + $0xc0] sm:$0xff]
        %v900 = vld [vmem:[#allocation5 + $0xc8] sm:$0xff]
        %v901 = vld [vmem:[#allocation5 + $0xd0] sm:$0xff]
        %v902 = vld [vmem:[#allocation5 + $0xd8] sm:$0xff]
        %v903 = vld [vmem:[#allocation5 + $0xe0] sm:$0xff]
        %v904 = vld [vmem:[#allocation5 + $0xe8] sm:$0xff]
        %v905 = vld [vmem:[#allocation5 + $0xf0] sm:$0xff]
        %v906 = vld [vmem:[#allocation5 + $0xf8] sm:$0xff]
        %v907 = vld [vmem:[#allocation5 + $0x100] sm:$0xff]
        %v908 = vld [vmem:[#allocation5 + $0x108] sm:$0xff]
        %v909 = vld [vmem:[#allocation5 + $0x110] sm:$0xff]
        %v910 = vld [vmem:[#allocation5 + $0x118] sm:$0xff]
        %v911 = vld [vmem:[#allocation5 + $0x120] sm:$0xff]
        %v912 = vld [vmem:[#allocation5 + $0x128] sm:$0xff]
        %v913 = vld [vmem:[#allocation5 + $0x130] sm:$0xff]
        %v914 = vld [vmem:[#allocation5 + $0x138] sm:$0xff]
        %v915 = vld [vmem:[#allocation5 + $0x140] sm:$0xff]
        %v916 = vld [vmem:[#allocation5 + $0x148] sm:$0xff]
        %v917 = vld [vmem:[#allocation5 + $0x150] sm:$0xff]
        %v918 = vld [vmem:[#allocation5 + $0x158] sm:$0xff]
        %v919 = vld [vmem:[#allocation5 + $0x160] sm:$0xff]
        %v920 = vld [vmem:[#allocation5 + $0x168] sm:$0xff]
        %v921 = vld [vmem:[#allocation5 + $0x170] sm:$0xff]
        %v922 = vld [vmem:[#allocation5 + $0x178] sm:$0xff]
        %v923 = vld [vmem:[#allocation5 + $0x180] sm:$0xff]
        %v924 = vld [vmem:[#allocation5 + $0x188] sm:$0xff]
        %v925 = vld [vmem:[#allocation5 + $0x190] sm:$0xff]
        %v926 = vld [vmem:[#allocation5 + $0x198] sm:$0xff]
        %v927 = vld [vmem:[#allocation5 + $0x1a0] sm:$0xff]
        %v928 = vld [vmem:[#allocation5 + $0x1a8] sm:$0xff]
        %v929 = vld [vmem:[#allocation5 + $0x1b0] sm:$0xff]
        %v930 = vld [vmem:[#allocation5 + $0x1b8] sm:$0xff]
        %v931 = vld [vmem:[#allocation5 + $0x1c0] sm:$0xff]
        %v932 = vld [vmem:[#allocation5 + $0x1c8] sm:$0xff]
        %v933 = vld [vmem:[#allocation5 + $0x1d0] sm:$0xff]
        %v934 = vld [vmem:[#allocation5 + $0x1d8] sm:$0xff]
        %v935 = vld [vmem:[#allocation5 + $0x1e0] sm:$0xff]
        %v936 = vld [vmem:[#allocation5 + $0x1e8] sm:$0xff]
        %v937 = vld [vmem:[#allocation5 + $0x1f0] sm:$0xff]
        %v938 = vld [vmem:[#allocation5 + $0x1f8] sm:$0xff]
        %v945 = vsel %vm431, %v817, %v815
        %v946 = vsel %vm433, %v819, %v945
        %v947 = vsel %vm431, %v818, %v816
        %v948 = vsel %vm433, %v820, %v947
        %v957 = vsel %vm431, %v847, %v829
        %v958 = vsel %vm433, %v865, %v957
        %v959 = vsel %vm431, %v856, %v838
        %v960 = vsel %vm433, %v874, %v959
        %v963 = vpack.c.bf16 %v946, %v946
        %v964 = vpack.c.bf16 %v948, %v948
        %v965 = vpack.c.bf16 %v958, %v958
        %v966 = vpack.c.bf16 %v960, %v960
        %v1031 = vunpack.c.l.b16 %v875
        %v1032 = vunpack.c.h.b16 %v875
        %v1033 = vunpack.c.l.b16 %v876
        %v1034 = vunpack.c.h.b16 %v876
        %v1035 = vunpack.c.l.b16 %v877
        %v1036 = vunpack.c.h.b16 %v877
        %v1037 = vunpack.c.l.b16 %v878
        %v1038 = vunpack.c.h.b16 %v878
        %v1039 = vunpack.c.l.b16 %v879
        %v1040 = vunpack.c.h.b16 %v879
        %v1041 = vunpack.c.l.b16 %v880
        %v1042 = vunpack.c.h.b16 %v880
        %v1043 = vunpack.c.l.b16 %v881
        %v1044 = vunpack.c.h.b16 %v881
        %v1045 = vunpack.c.l.b16 %v882
        %v1046 = vunpack.c.h.b16 %v882
        %v1047 = vunpack.c.l.b16 %v883
        %v1048 = vunpack.c.h.b16 %v883
        %v1049 = vunpack.c.l.b16 %v884
        %v1050 = vunpack.c.h.b16 %v884
        %v1051 = vunpack.c.l.b16 %v885
        %v1052 = vunpack.c.h.b16 %v885
        %v1053 = vunpack.c.l.b16 %v886
        %v1054 = vunpack.c.h.b16 %v886
        %v1055 = vunpack.c.l.b16 %v887
        %v1056 = vunpack.c.h.b16 %v887
        %v1057 = vunpack.c.l.b16 %v888
        %v1058 = vunpack.c.h.b16 %v888
        %v1059 = vunpack.c.l.b16 %v889
        %v1060 = vunpack.c.h.b16 %v889
        %v1061 = vunpack.c.l.b16 %v890
        %v1062 = vunpack.c.h.b16 %v890
        %v1063 = vunpack.c.l.b16 %v891
        %v1064 = vunpack.c.h.b16 %v891
        %v1065 = vunpack.c.l.b16 %v892
        %v1066 = vunpack.c.h.b16 %v892
        %v1067 = vunpack.c.l.b16 %v893
        %v1068 = vunpack.c.h.b16 %v893
        %v1069 = vunpack.c.l.b16 %v894
        %v1070 = vunpack.c.h.b16 %v894
        %v1071 = vunpack.c.l.b16 %v895
        %v1072 = vunpack.c.h.b16 %v895
        %v1073 = vunpack.c.l.b16 %v896
        %v1074 = vunpack.c.h.b16 %v896
        %v1075 = vunpack.c.l.b16 %v897
        %v1076 = vunpack.c.h.b16 %v897
        %v1077 = vunpack.c.l.b16 %v898
        %v1078 = vunpack.c.h.b16 %v898
        %v1079 = vunpack.c.l.b16 %v899
        %v1080 = vunpack.c.h.b16 %v899
        %v1081 = vunpack.c.l.b16 %v900
        %v1082 = vunpack.c.h.b16 %v900
        %v1083 = vunpack.c.l.b16 %v901
        %v1084 = vunpack.c.h.b16 %v901
        %v1085 = vunpack.c.l.b16 %v902
        %v1086 = vunpack.c.h.b16 %v902
        %v1087 = vunpack.c.l.b16 %v903
        %v1088 = vunpack.c.h.b16 %v903
        %v1089 = vunpack.c.l.b16 %v904
        %v1090 = vunpack.c.h.b16 %v904
        %v1091 = vunpack.c.l.b16 %v905
        %v1092 = vunpack.c.h.b16 %v905
        %v1093 = vunpack.c.l.b16 %v906
        %v1094 = vunpack.c.h.b16 %v906
        %v1095 = vunpack.c.l.b16 %v907
        %v1096 = vunpack.c.h.b16 %v907
        %v1097 = vunpack.c.l.b16 %v908
        %v1098 = vunpack.c.h.b16 %v908
        %v1099 = vunpack.c.l.b16 %v909
        %v1100 = vunpack.c.h.b16 %v909
        %v1101 = vunpack.c.l.b16 %v910
        %v1102 = vunpack.c.h.b16 %v910
        %v1103 = vunpack.c.l.b16 %v911
        %v1104 = vunpack.c.h.b16 %v911
        %v1105 = vunpack.c.l.b16 %v912
        %v1106 = vunpack.c.h.b16 %v912
        %v1107 = vunpack.c.l.b16 %v913
        %v1108 = vunpack.c.h.b16 %v913
        %v1109 = vunpack.c.l.b16 %v914
        %v1110 = vunpack.c.h.b16 %v914
        %v1111 = vunpack.c.l.b16 %v915
        %v1112 = vunpack.c.h.b16 %v915
        %v1113 = vunpack.c.l.b16 %v916
        %v1114 = vunpack.c.h.b16 %v916
        %v1115 = vunpack.c.l.b16 %v917
        %v1116 = vunpack.c.h.b16 %v917
        %v1117 = vunpack.c.l.b16 %v918
        %v1118 = vunpack.c.h.b16 %v918
        %v1119 = vunpack.c.l.b16 %v919
        %v1120 = vunpack.c.h.b16 %v919
        %v1121 = vunpack.c.l.b16 %v920
        %v1122 = vunpack.c.h.b16 %v920
        %v1123 = vunpack.c.l.b16 %v921
        %v1124 = vunpack.c.h.b16 %v921
        %v1125 = vunpack.c.l.b16 %v922
        %v1126 = vunpack.c.h.b16 %v922
        %v1127 = vunpack.c.l.b16 %v923
        %v1128 = vunpack.c.h.b16 %v923
        %v1129 = vunpack.c.l.b16 %v924
        %v1130 = vunpack.c.h.b16 %v924
        %v1131 = vunpack.c.l.b16 %v925
        %v1132 = vunpack.c.h.b16 %v925
        %v1133 = vunpack.c.l.b16 %v926
        %v1134 = vunpack.c.h.b16 %v926
        %v1135 = vunpack.c.l.b16 %v927
        %v1136 = vunpack.c.h.b16 %v927
        %v1137 = vunpack.c.l.b16 %v928
        %v1138 = vunpack.c.h.b16 %v928
        %v1139 = vunpack.c.l.b16 %v929
        %v1140 = vunpack.c.h.b16 %v929
        %v1141 = vunpack.c.l.b16 %v930
        %v1142 = vunpack.c.h.b16 %v930
        %v1143 = vunpack.c.l.b16 %v931
        %v1144 = vunpack.c.h.b16 %v931
        %v1145 = vunpack.c.l.b16 %v932
        %v1146 = vunpack.c.h.b16 %v932
        %v1147 = vunpack.c.l.b16 %v933
        %v1148 = vunpack.c.h.b16 %v933
        %v1149 = vunpack.c.l.b16 %v934
        %v1150 = vunpack.c.h.b16 %v934
        %v1151 = vunpack.c.l.b16 %v935
        %v1152 = vunpack.c.h.b16 %v935
        %v1153 = vunpack.c.l.b16 %v936
        %v1154 = vunpack.c.h.b16 %v936
        %v1155 = vunpack.c.l.b16 %v937
        %v1156 = vunpack.c.h.b16 %v937
        %v1157 = vunpack.c.l.b16 %v938
        %v1158 = vunpack.c.h.b16 %v938
        %v1159 = vpack.c.b16 %v1033, %v1031
        %v1160 = vpack.c.b16 %v1034, %v1032
        %v1161 = vpack.c.b16 %v1037, %v1035
        %v1162 = vpack.c.b16 %v1038, %v1036
        %v1163 = vpack.c.b16 %v1041, %v1039
        %v1164 = vpack.c.b16 %v1042, %v1040
        %v1165 = vpack.c.b16 %v1045, %v1043
        %v1166 = vpack.c.b16 %v1046, %v1044
        %v1167 = vpack.c.b16 %v1049, %v1047
        %v1168 = vpack.c.b16 %v1050, %v1048
        %v1169 = vpack.c.b16 %v1053, %v1051
        %v1170 = vpack.c.b16 %v1054, %v1052
        %v1171 = vpack.c.b16 %v1057, %v1055
        %v1172 = vpack.c.b16 %v1058, %v1056
        %v1173 = vpack.c.b16 %v1061, %v1059
        %v1174 = vpack.c.b16 %v1062, %v1060
        %v1175 = vpack.c.b16 %v1065, %v1063
        %v1176 = vpack.c.b16 %v1066, %v1064
        %v1177 = vpack.c.b16 %v1069, %v1067
        %v1178 = vpack.c.b16 %v1070, %v1068
        %v1179 = vpack.c.b16 %v1073, %v1071
        %v1180 = vpack.c.b16 %v1074, %v1072
        %v1181 = vpack.c.b16 %v1077, %v1075
        %v1182 = vpack.c.b16 %v1078, %v1076
        %v1183 = vpack.c.b16 %v1081, %v1079
        %v1184 = vpack.c.b16 %v1082, %v1080
        %v1185 = vpack.c.b16 %v1085, %v1083
        %v1186 = vpack.c.b16 %v1086, %v1084
        %v1187 = vpack.c.b16 %v1089, %v1087
        %v1188 = vpack.c.b16 %v1090, %v1088
        %v1189 = vpack.c.b16 %v1093, %v1091
        %v1190 = vpack.c.b16 %v1094, %v1092
        %v1191 = vpack.c.b16 %v1097, %v1095
        %v1192 = vpack.c.b16 %v1098, %v1096
        %v1193 = vpack.c.b16 %v1101, %v1099
        %v1194 = vpack.c.b16 %v1102, %v1100
        %v1195 = vpack.c.b16 %v1105, %v1103
        %v1196 = vpack.c.b16 %v1106, %v1104
        %v1197 = vpack.c.b16 %v1109, %v1107
        %v1198 = vpack.c.b16 %v1110, %v1108
        %v1199 = vpack.c.b16 %v1113, %v1111
        %v1200 = vpack.c.b16 %v1114, %v1112
        %v1201 = vpack.c.b16 %v1117, %v1115
        %v1202 = vpack.c.b16 %v1118, %v1116
        %v1203 = vpack.c.b16 %v1121, %v1119
        %v1204 = vpack.c.b16 %v1122, %v1120
        %v1205 = vpack.c.b16 %v1125, %v1123
        %v1206 = vpack.c.b16 %v1126, %v1124
        %v1207 = vpack.c.b16 %v1129, %v1127
        %v1208 = vpack.c.b16 %v1130, %v1128
        %v1209 = vpack.c.b16 %v1133, %v1131
        %v1210 = vpack.c.b16 %v1134, %v1132
        %v1211 = vpack.c.b16 %v1137, %v1135
        %v1212 = vpack.c.b16 %v1138, %v1136
        %v1213 = vpack.c.b16 %v1141, %v1139
        %v1214 = vpack.c.b16 %v1142, %v1140
        %v1215 = vpack.c.b16 %v1145, %v1143
        %v1216 = vpack.c.b16 %v1146, %v1144
        %v1217 = vpack.c.b16 %v1149, %v1147
        %v1218 = vpack.c.b16 %v1150, %v1148
        %v1219 = vpack.c.b16 %v1153, %v1151
        %v1220 = vpack.c.b16 %v1154, %v1152
        %v1221 = vpack.c.b16 %v1157, %v1155
        %v1222 = vpack.c.b16 %v1158, %v1156
        %1287 = vmatprep.subr.bf16.mxu0 %v1160
        %1288 = vmatpush1.bf16.msra.mxu0 %v1159
        %1289 = vmatprep.subr.bf16.mxu0 %v1162
        %1290 = vmatpush1.bf16.msra.mxu0 %v1161
        %1291 = vmatprep.subr.bf16.mxu0 %v1164
        %1292 = vmatpush1.bf16.msra.mxu0 %v1163
        %1293 = vmatprep.subr.bf16.mxu0 %v1166
        %1294 = vmatpush1.bf16.msra.mxu0 %v1165
        %1295 = vmatprep.subr.bf16.mxu0 %v1168
        %1296 = vmatpush1.bf16.msra.mxu0 %v1167
        %1297 = vmatprep.subr.bf16.mxu0 %v1170
        %1298 = vmatpush1.bf16.msra.mxu0 %v1169
        %1299 = vmatprep.subr.bf16.mxu0 %v1172
        %1300 = vmatpush1.bf16.msra.mxu0 %v1171
        %1301 = vmatprep.subr.bf16.mxu0 %v1174
        %1302 = vmatpush1.bf16.msra.mxu0 %v1173
        %1303 = vmatprep.subr.bf16.mxu0 %v1176
        %1304 = vmatpush1.bf16.msra.mxu0 %v1175
        %1305 = vmatprep.subr.bf16.mxu0 %v1178
        %1306 = vmatpush1.bf16.msra.mxu0 %v1177
        %1307 = vmatprep.subr.bf16.mxu0 %v1180
        %1308 = vmatpush1.bf16.msra.mxu0 %v1179
        %1309 = vmatprep.subr.bf16.mxu0 %v1182
        %1310 = vmatpush1.bf16.msra.mxu0 %v1181
        %1311 = vmatprep.subr.bf16.mxu0 %v1184
        %1312 = vmatpush1.bf16.msra.mxu0 %v1183
        %1313 = vmatprep.subr.bf16.mxu0 %v1186
        %1314 = vmatpush1.bf16.msra.mxu0 %v1185
        %1315 = vmatprep.subr.bf16.mxu0 %v1188
        %1316 = vmatpush1.bf16.msra.mxu0 %v1187
        %1317 = vmatprep.subr.bf16.mxu0 %v1190
        %1318 = vmatpush1.bf16.msra.mxu0 %v1189
        %1319 = vmatprep.mubr.bf16.mxu0 %v964
        %1320 = vmatmul.mubr.bf16.gmra.mrb[0].mxu0 %v963
        %v1321 = vpop.f32.mrb[0].mxu0
        %v1322 = vadd.f32 0.0, %v1321
        %v1323 = vpop.f32.mrb[0].mxu0
        %v1324 = vadd.f32 0.0, %v1323
        %v1325 = vpop.f32.mrb[0].mxu0
        %v1326 = vpop.f32.mrb[0].mxu0
        %1327 = vdwg.mxu0
        %1328 = vmatprep.subr.bf16.mxu0 %v1192
        %1329 = vmatpush1.bf16.msra.mxu0 %v1191
        %1330 = vmatprep.subr.bf16.mxu0 %v1194
        %1331 = vmatpush1.bf16.msra.mxu0 %v1193
        %1332 = vmatprep.subr.bf16.mxu0 %v1196
        %1333 = vmatpush1.bf16.msra.mxu0 %v1195
        %1334 = vmatprep.subr.bf16.mxu0 %v1198
        %1335 = vmatpush1.bf16.msra.mxu0 %v1197
        %1336 = vmatprep.subr.bf16.mxu0 %v1200
        %1337 = vmatpush1.bf16.msra.mxu0 %v1199
        %1338 = vmatprep.subr.bf16.mxu0 %v1202
        %1339 = vmatpush1.bf16.msra.mxu0 %v1201
        %1340 = vmatprep.subr.bf16.mxu0 %v1204
        %1341 = vmatpush1.bf16.msra.mxu0 %v1203
        %1342 = vmatprep.subr.bf16.mxu0 %v1206
        %1343 = vmatpush1.bf16.msra.mxu0 %v1205
        %1344 = vmatprep.subr.bf16.mxu0 %v1208
        %1345 = vmatpush1.bf16.msra.mxu0 %v1207
        %1346 = vmatprep.subr.bf16.mxu0 %v1210
        %1347 = vmatpush1.bf16.msra.mxu0 %v1209
        %1348 = vmatprep.subr.bf16.mxu0 %v1212
        %1349 = vmatpush1.bf16.msra.mxu0 %v1211
        %1350 = vmatprep.subr.bf16.mxu0 %v1214
        %1351 = vmatpush1.bf16.msra.mxu0 %v1213
        %1352 = vmatprep.subr.bf16.mxu0 %v1216
        %1353 = vmatpush1.bf16.msra.mxu0 %v1215
        %1354 = vmatprep.subr.bf16.mxu0 %v1218
        %1355 = vmatpush1.bf16.msra.mxu0 %v1217
        %1356 = vmatprep.subr.bf16.mxu0 %v1220
        %1357 = vmatpush1.bf16.msra.mxu0 %v1219
        %1358 = vmatprep.subr.bf16.mxu0 %v1222
        %1359 = vmatpush1.bf16.msra.mxu0 %v1221
        %1360 = vmatprep.mubr.bf16.mxu0 %v966
        %1361 = vmatmul.mubr.bf16.gmra.mrb[0].mxu0 %v965
        %v1362 = vpop.f32.mrb[0].mxu0
        %v1363 = vadd.f32 %v1322, %v1362
        %v1364 = vpop.f32.mrb[0].mxu0
        %v1365 = vadd.f32 %v1324, %v1364
        %v1366 = vpop.f32.mrb[0].mxu0
        %v1367 = vpop.f32.mrb[0].mxu0
        %1368 = vdwg.mxu0
        %v1369 = vxor.u32 %v1363, 2147483648
        %v1370 = vxor.u32 %v1365, 2147483648
        %v1371 = vmul.f32 %v1369, 1.442695
        %v1372 = vpow.pop %v1371
        %v1373 = vmul.f32 %v1370, 1.442695
        %v1374 = vpow.pop %v1373
        %v1375 = vadd.f32 %v1372, 1.0
        %v1376 = vadd.f32 %v1374, 1.0
        %v1377 = vrcp.pop %v1375
        %v1378 = vmul.f32 1.0, %v1377
        %v1379 = vrcp.pop %v1376
        %v1380 = vmul.f32 1.0, %v1379
        %v1383 = vcombine.low %v1378, %v1380
        %v1385 = vunpack.c.l.s4 1966171168
        %v1386 = vunpack.c.0.s8 %v1385
        %v1387 = vlaneseq
        %v1388 = vshrl.u32 %v1387, 7
        %v1389 = vsub.s32 %v1386, %v1388
        %v1390 = vrot.slane %v1383, %v1389
        %v1391 = vcombine.high %v1390, %v1390
        %v1393 = vunpack.c.l.s4 1966171168
        %v1394 = vunpack.c.0.s8 %v1393
        %v1395 = vlaneseq
        %v1396 = vshrl.u32 %v1395, 7
        %v1397 = vsub.s32 %v1394, %v1396
        %v1398 = vrot.slane %v1390, %v1397
        %v1400 = vunpack.c.l.s4 1966171168
        %v1401 = vunpack.c.0.s8 %v1400
        %v1402 = vlaneseq
        %v1403 = vshrl.u32 %v1402, 7
        %v1404 = vsub.s32 %v1401, %v1403
        %v1405 = vrot.slane %v1391, %v1404
        %v1406 = vcombine.high %v1398, %v1398
        %v1407 = vlaneseq
        %v1408 = vshrl.u32 %v1407, 7
        %v1409 = vsub.s32 0, %v1408
        %v1410 = vrot.slane %v1398, %v1409
        %v1411 = vlaneseq
        %v1412 = vshrl.u32 %v1411, 7
        %v1413 = vsub.s32 1, %v1412
        %v1414 = vrot.slane %v1398, %v1413
        %v1415 = vlaneseq
        %v1416 = vshrl.u32 %v1415, 7
        %v1417 = vsub.s32 0, %v1416
        %v1418 = vrot.slane %v1405, %v1417
        %v1419 = vlaneseq
        %v1420 = vshrl.u32 %v1419, 7
        %v1421 = vsub.s32 1, %v1420
        %v1422 = vrot.slane %v1405, %v1421
        %v1423 = vlaneseq
        %v1424 = vshrl.u32 %v1423, 7
        %v1425 = vsub.s32 0, %v1424
        %v1426 = vrot.slane %v1406, %v1425
        %v1427 = vlaneseq
        %v1428 = vshrl.u32 %v1427, 7
        %v1429 = vsub.s32 1, %v1428
        %v1430 = vrot.slane %v1406, %v1429
        %v1437 = vmul.f32 %v737, %v1410
        %v1438 = vmul.f32 %v738, %v1414
        %v1439 = vmul.f32 %v739, %v1410
        %v1440 = vmul.f32 %v740, %v1414
        %v1441 = vmul.f32 %v741, %v1410
        %v1442 = vmul.f32 %v742, %v1414
        %v1443 = vmul.f32 %v743, %v1410
        %v1444 = vmul.f32 %v744, %v1414
        %v1445 = vmul.f32 %v745, %v1418
        %v1446 = vmul.f32 %v746, %v1422
        %v1447 = vmul.f32 %v747, %v1418
        %v1448 = vmul.f32 %v748, %v1422
        %v1449 = vmul.f32 %v749, %v1418
        %v1450 = vmul.f32 %v750, %v1422
        %v1451 = vmul.f32 %v751, %v1418
        %v1452 = vmul.f32 %v752, %v1422
        %v1453 = vmul.f32 %v753, %v1426
        %v1454 = vmul.f32 %v754, %v1430
        %v1455 = vmul.f32 %v755, %v1426
        %v1456 = vmul.f32 %v756, %v1430
        %v1457 = vmul.f32 %v757, %v1426
        %v1458 = vmul.f32 %v758, %v1430
        %v1459 = vmul.f32 %v759, %v1426
        %v1460 = vmul.f32 %v760, %v1430
        %v1461 = vpack.c.bf16 %v1439, %v1437
        %v1462 = vpack.c.bf16 %v1440, %v1438
        %v1463 = vpack.c.bf16 %v1443, %v1441
        %v1464 = vpack.c.bf16 %v1444, %v1442
        %v1465 = vpack.c.bf16 %v1447, %v1445
        %v1466 = vpack.c.bf16 %v1448, %v1446
        %v1467 = vpack.c.bf16 %v1451, %v1449
        %v1468 = vpack.c.bf16 %v1452, %v1450
        %v1469 = vpack.c.bf16 %v1455, %v1453
        %v1470 = vpack.c.bf16 %v1456, %v1454
        %v1471 = vpack.c.bf16 %v1459, %v1457
        %v1472 = vpack.c.bf16 %v1460, %v1458
        %v1485 = vunpack.c.l.b16 %v1461
        %v1486 = vunpack.c.l.b16 %v1462
        %v1487 = vunpack.c.h.b16 %v1461
        %v1488 = vunpack.c.h.b16 %v1462
        %v1489 = vunpack.c.l.b16 %v1463
        %v1490 = vunpack.c.l.b16 %v1464
        %v1491 = vunpack.c.h.b16 %v1463
        %v1492 = vunpack.c.h.b16 %v1464
        %v1493 = vunpack.c.l.b16 %v1465
        %v1494 = vunpack.c.l.b16 %v1466
        %v1495 = vunpack.c.h.b16 %v1465
        %v1496 = vunpack.c.h.b16 %v1466
        %v1497 = vunpack.c.l.b16 %v1467
        %v1498 = vunpack.c.l.b16 %v1468
        %v1499 = vunpack.c.h.b16 %v1467
        %v1500 = vunpack.c.h.b16 %v1468
        %v1501 = vunpack.c.l.b16 %v1469
        %v1502 = vunpack.c.l.b16 %v1470
        %v1503 = vunpack.c.h.b16 %v1469
        %v1504 = vunpack.c.h.b16 %v1470
        %v1505 = vunpack.c.l.b16 %v1471
        %v1506 = vunpack.c.l.b16 %v1472
        %v1507 = vunpack.c.h.b16 %v1471
        %v1508 = vunpack.c.h.b16 %v1472
        %v1509 = vpack.c.b16 %v1486, %v1485
        %v1510 = vpack.c.b16 %v1488, %v1487
        %v1511 = vpack.c.b16 %v1490, %v1489
        %v1512 = vpack.c.b16 %v1492, %v1491
        %v1513 = vpack.c.b16 %v1494, %v1493
        %v1514 = vpack.c.b16 %v1496, %v1495
        %v1515 = vpack.c.b16 %v1498, %v1497
        %v1516 = vpack.c.b16 %v1500, %v1499
        %v1517 = vpack.c.b16 %v1502, %v1501
        %v1518 = vpack.c.b16 %v1504, %v1503
        %v1519 = vpack.c.b16 %v1506, %v1505
        %v1520 = vpack.c.b16 %v1508, %v1507
        %1533 = vst [vmem:[%s231] sm:$0xff] %v1509
        %1534 = vst [vmem:[%s231 + $0x8] sm:$0xff] %v1510
        %1535 = vst [vmem:[%s231 + $0x10] sm:$0xff] %v1511
        %1536 = vst [vmem:[%s231 + $0x18] sm:$0xff] %v1512
        %1537 = vst [vmem:[%s231 + $0x20] sm:$0xff] %v1513
        %1538 = vst [vmem:[%s231 + $0x28] sm:$0xff] %v1514
        %1539 = vst [vmem:[%s231 + $0x30] sm:$0xff] %v1515
        %1540 = vst [vmem:[%s231 + $0x38] sm:$0xff] %v1516
        %1541 = vst [vmem:[%s231 + $0x40] sm:$0xff] %v1517
        %1542 = vst [vmem:[%s231 + $0x48] sm:$0xff] %v1518
        %1543 = vst [vmem:[%s231 + $0x50] sm:$0xff] %v1519
        %1544 = vst [vmem:[%s231 + $0x58] sm:$0xff] %v1520
        %s1545 = sand.u32 %s119, 1
        %s1546 = scalar_lea.sflag [#allocation4], %s1545
        %s1547 = sand.u32 %s119, 1
        %s1548 = smul.addr %s1547, 96
        %s1549 = scalar_lea.vmem [#allocation7], %s1548
        // Predicated region
        $region45: #{tpu_custom_call.1} parent=35 // pred_check
          %p1550 = pneg %p129
        $region46: #{tpu_custom_call.1} parent=35 // pred_check_branch
          %1552 = sbr.rel (%p1550) target = $region48
        $region47: #{tpu_custom_call.1} parent=35 // pred_region
          %s1553 = smul.u32 3, %s22
          %s1555 = ssub.s32 1536, 1536
          %1556 = vsyncadd %s1546, %s1555
          %s1557 = smul.addr %s1553, 8
          %s1558 = smul.addr %s1557, 64
          %s1559 = scalar_lea.hbm %s4, %s1558
          %s1560 = sshll.u32 %s1549, 4
          %s1561 = int_to_ptr.vmem [resolvable:$true] %s1560
          %1566 = dma.vmem_to_hbm [thread:$0]  %s1561, 1536, %s1559, %s1546, 128, 128, 8
        $region48: #{tpu_custom_call.1} parent=35 // pred_fallthru
          _
      $region36: #{tpu_custom_call.1} parent=5 // pred_fallthru
        _
      %p1567 = scmp.le.s32.totalorder 2, %s17
      // Predicated region
      $region49: #{tpu_custom_call.1} parent=5 // pred_check
        %p1568 = pneg %p1567
      $region50: #{tpu_custom_call.1} parent=5 // pred_check_branch
        %1570 = sbr.rel (%p1568) target = $region52
      $region51: #{tpu_custom_call.1} parent=5 // pred_region
        %s1571 = ssub.s32 %s17, 2
        // Predicated region
        $region53: #{tpu_custom_call.1} parent=51 // pred_check
          %p1572 = pneg %p135
        $region54: #{tpu_custom_call.1} parent=51 // pred_check_branch
          %1574 = sbr.rel (%p1572) target = $region56
        $region55: #{tpu_custom_call.1} parent=51 // pred_region
          %s1575 = sand.u32 %s120, 1
          %s1576 = scalar_lea.sflag [#allocation4], %s1575
          %s1577 = sand.u32 %s120, 1
          %s1578 = smul.addr %s1577, 96
          %s1579 = scalar_lea.vmem [#allocation7], %s1578
          %1580 = dma.done %s1576, 1536
        $region56: #{tpu_custom_call.1} parent=51 // pred_fallthru
          _
      $region52: #{tpu_custom_call.1} parent=5 // pred_fallthru
        _
    $region6: #{tpu_custom_call.1} parent=1 // loop_footer
      %s21 = sadd.s32 1, %s17
    $region7: #{tpu_custom_call.1} parent=1 // loop_footer_branch
      %16 = sbr.rel target = $region3
    $region8: #{tpu_custom_call.1} parent=1 // loop_exit
      _
    %1581 = vsyncpa [#allocation3], 1
    %s1582 = scalar_lea.sflag [#allocation3], 1
    %1583 = vsyncpa %s1582, 1
    %1584 = vsyncpa [#allocation6], 1
    %1585 = vsyncpa [#allocation4], 1
    %s1586 = scalar_lea.sflag [#allocation4], 1
    %1587 = vsyncpa %s1586, 1

</llo_original>
